<compile_context>
chip_gen: v5e
topology: v5e:2x2
jax: 0.10.0
libtpu: 0.0.40
codegen_flags: <defaults>
</compile_context>

<pallas_src>
import jax
import jax.numpy as jnp
from jax.experimental import pallas as pl
from jax.experimental.pallas import tpu as pltpu

IN_DIM = 32 * 32 * 3          # 3072
OUT_DIM = 3                   # real logits width
OUT_PAD = 128                 # lane-dense padded logits width
# torch layer shapes (Linear as [in, out] here):
LAYER_DIMS = [(IN_DIM, 256), (256, 64), (64, 28), (28, OUT_DIM)]
# MXU work actually done by the kernel (last layer padded to 128 lanes):
MXU_DIMS = [(IN_DIM, 256), (256, 64), (64, 28), (28, OUT_PAD)]


def mask_mlp_kernel(x_ref,
                    w1_ref, t1_ref,
                    w2_ref, t2_ref,
                    w3_ref, t3_ref,
                    w4_ref, b4_ref,
                    o_ref):
    # Per-tile f32 -> bf16 cast (VPU) instead of a separate HBM cast pass.
    x = x_ref[...].astype(jnp.bfloat16)
    # Layer 1: fc1 (+BN folded into W and t) + ReLU   [TB,3072]@[3072,256]
    h1 = jnp.dot(x, w1_ref[...], preferred_element_type=jnp.float32)
    h1 = jnp.maximum(h1 + t1_ref[...], 0.0).astype(jnp.bfloat16)
    # Layer 2: fc2 (+BN) + ReLU                       [TB,256]@[256,64]
    h2 = jnp.dot(h1, w2_ref[...], preferred_element_type=jnp.float32)
    h2 = jnp.maximum(h2 + t2_ref[...], 0.0).astype(jnp.bfloat16)
    # Layer 3: fc3 (+BN) + ReLU                       [TB,64]@[64,28]
    h3 = jnp.dot(h2, w3_ref[...], preferred_element_type=jnp.float32)
    h3 = jnp.maximum(h3 + t3_ref[...], 0.0).astype(jnp.bfloat16)
    # Layer 4: fc4 (plain linear, zero-padded to 128 lanes) [TB,28]@[28,128]
    out = jnp.dot(h3, w4_ref[...], preferred_element_type=jnp.float32)
    o_ref[...] = (out + b4_ref[...]).astype(o_ref.dtype)
    # NOTE: Dropout layers are eval-mode identity and intentionally omitted.


def _cdiv(a, b):
    return -(-a // b)


def _round_up(x, m):
    return _cdiv(x, m) * m


def _default_tile_rows():
    """Batch tile from physical VMEM: 1024 rows on 128-MiB chips (v5e/v6e),
    512 rows on 64-MiB chips (v7x).  Falls back to the safe 512."""
    try:
        vmem = pltpu.get_tpu_info().vmem_capacity_bytes
    except Exception:  # pragma: no cover - query not available everywhere
        return 512
    return 1024 if vmem >= 128 * 1024 * 1024 else 512


def mask_model_forward(x_nchw, params, *, tb=None):
    """x_nchw: [B, 3, 32, 32] float32. Returns logits [B, 3] float32."""
    B = x_nchw.shape[0]
    # torch: x.view(-1, 32*32*3).  Keep f32 -- the bf16 cast happens per-tile
    # inside the kernel, so there is no extra HBM cast/copy pass.
    x = x_nchw.reshape(B, IN_DIM)

    if tb is None:
        tb = _default_tile_rows()
    bp8 = _round_up(B, 8)
    tb = _round_up(min(tb, bp8), 8)
    # If everything fits in one block but the batch is non-trivial, split it
    # into (at least) 2 parallel steps so v7x's two TensorCores both work.
    if _cdiv(bp8, tb) == 1 and bp8 >= 64:
        tb = _round_up(_cdiv(bp8, 2), 8)
    grid = (_cdiv(B, tb),)

    inputs = (
        x,
        params["w1"], params["t1"],
        params["w2"], params["t2"],
        params["w3"], params["t3"],
        params["w4"], params["b4"],
    )

    def const_spec(arr):
        # Whole array, same block every grid step -> fetched once, VMEM-resident.
        return pl.BlockSpec(arr.shape, lambda i: (0,) * arr.ndim)

    in_specs = [pl.BlockSpec((tb, IN_DIM), lambda i: (i, 0))]
    in_specs += [const_spec(a) for a in inputs[1:]]
    # Lane-dense (tb, 128) output blocks -> full-lane stores / wide writeback DMA.
    out_specs = pl.BlockSpec((tb, OUT_PAD), lambda i: (i, 0))

    rows = grid[0] * tb
    flops = 2 * rows * sum(din * dout for din, dout in MXU_DIMS)
    bytes_accessed = (
        rows * IN_DIM * 4                                    # x (f32, streamed)
        + sum(din * dout * 2 for din, dout in MXU_DIMS)      # weights (bf16)
        + sum(dout * 4 for _, dout in MXU_DIMS)              # shifts/bias (f32)
        + rows * OUT_PAD * 4                                 # padded output (f32)
    )

    out = pl.pallas_call(
        mask_mlp_kernel,
        out_shape=jax.ShapeDtypeStruct((B, OUT_PAD), jnp.float32),
        grid=grid,
        in_specs=in_specs,
        out_specs=out_specs,
        compiler_params=pltpu.CompilerParams(
            dimension_semantics=("parallel",),
            vmem_limit_bytes=48 * 1024 * 1024,
        ),
        cost_estimate=pl.CostEstimate(
            flops=flops, transcendentals=0, bytes_accessed=bytes_accessed),
    )(*inputs)
    # Drop the zero-padded logit lanes; rows past B never exist in `out`.
    return out[:, :OUT_DIM]


def make_params(key):
    """Deterministic synthetic params mirroring MaskModel.__init__ shapes.

    Linear weights are stored as [in, out] (transpose of torch.nn.Linear),
    with eval-mode BatchNorm folded in:
      scale = gamma / sqrt(var + eps)
      W_folded = W * scale            (columns)
      t        = b * scale + beta - mean * scale
    Weights are kept in bf16; the additive shifts stay f32.  The final layer
    is zero-padded to 128 output columns for lane-dense stores.
    """
    keys = jax.random.split(key, 32)
    ki = iter(range(32))
    eps = 1e-5
    params = {}
    for li, (din, dout) in enumerate(LAYER_DIMS, start=1):
        w = jax.random.normal(keys[next(ki)], (din, dout), jnp.float32) * (1.0 / jnp.sqrt(din))
        b = jax.random.normal(keys[next(ki)], (dout,), jnp.float32) * 0.01
        if li < 4:
            gamma = 1.0 + 0.1 * jax.random.normal(keys[next(ki)], (dout,), jnp.float32)
            beta = 0.05 * jax.random.normal(keys[next(ki)], (dout,), jnp.float32)
            rmean = 0.1 * jax.random.normal(keys[next(ki)], (dout,), jnp.float32)
            rvar = jnp.abs(1.0 + 0.1 * jax.random.normal(keys[next(ki)], (dout,), jnp.float32))
            scale = gamma / jnp.sqrt(rvar + eps)
            shift = beta - rmean * scale
            params[f"w{li}"] = (w * scale[None, :]).astype(jnp.bfloat16)
            params[f"t{li}"] = (b * scale + shift).reshape(1, dout).astype(jnp.float32)
        else:
            # Zero-pad the final linear to OUT_PAD lanes (harmless: extra
            # columns stay exactly 0 and are sliced off in the wrapper).
            w_pad = jnp.zeros((din, OUT_PAD), jnp.float32).at[:, :dout].set(w)
            b_pad = jnp.zeros((OUT_PAD,), jnp.float32).at[:dout].set(b)
            params[f"w{li}"] = w_pad.astype(jnp.bfloat16)
            params[f"b{li}"] = b_pad.reshape(1, OUT_PAD).astype(jnp.float32)
    return params


def reference_forward(x_nchw, params):
    """Plain-JAX reference with the same bf16-weight / f32-accumulate recipe."""
    B = x_nchw.shape[0]
    h = x_nchw.reshape(B, IN_DIM).astype(jnp.bfloat16)
    for li in range(1, 4):
        y = jnp.dot(h, params[f"w{li}"], preferred_element_type=jnp.float32)
        h = jnp.maximum(y + params[f"t{li}"], 0.0).astype(jnp.bfloat16)
    out = jnp.dot(h, params["w4"], preferred_element_type=jnp.float32) + params["b4"]
    return out[:, :OUT_DIM]


if __name__ == "__main__":
    key = jax.random.PRNGKey(0)
    k_params, k_x = jax.random.split(key)
    params = make_params(k_params)

    B = 8
    x = jax.random.normal(k_x, (B, 3, 32, 32), jnp.float32)

    out = mask_model_forward(x, params)
    out = jax.block_until_ready(out)

    ref = reference_forward(x, params)
    assert out.shape == (B, OUT_DIM)
    assert jnp.allclose(out, ref, rtol=1e-3, atol=1e-3), "mismatch vs reference"

    print("KERNEL_OK")
</pallas_src>

<mosaic_0001>
module attributes {stable_mosaic.version = 11 : i64} {
  func.func @mask_mlp_kernel(%arg0: i32, %arg1: memref<8x3072xf32, #tpu.memory_space<vmem>>, %arg2: memref<3072x256xbf16, #tpu.memory_space<vmem>>, %arg3: memref<1x256xf32, #tpu.memory_space<vmem>>, %arg4: memref<256x64xbf16, #tpu.memory_space<vmem>>, %arg5: memref<1x64xf32, #tpu.memory_space<vmem>>, %arg6: memref<64x28xbf16, #tpu.memory_space<vmem>>, %arg7: memref<1x28xf32, #tpu.memory_space<vmem>>, %arg8: memref<28x128xbf16, #tpu.memory_space<vmem>>, %arg9: memref<1x128xf32, #tpu.memory_space<vmem>>, %arg10: memref<8x128xf32, #tpu.memory_space<vmem>>) attributes {dimension_semantics = [#tpu.dimension_semantics<parallel>], iteration_bounds = array<i64: 1>, scalar_prefetch = 0 : i64, scratch_operands = 0 : i64, tpu.core_type = #tpu.core_type<tc>, window_params = [{transform_indices = @transform_0, window_bounds = array<i64: 8, 3072>}, {pipeline_mode = #tpu.pipeline_mode<synchronous>, transform_indices = @transform_1, window_bounds = array<i64: 3072, 256>}, {pipeline_mode = #tpu.pipeline_mode<synchronous>, transform_indices = @transform_2, window_bounds = array<i64: 1, 256>}, {pipeline_mode = #tpu.pipeline_mode<synchronous>, transform_indices = @transform_3, window_bounds = array<i64: 256, 64>}, {pipeline_mode = #tpu.pipeline_mode<synchronous>, transform_indices = @transform_4, window_bounds = array<i64: 1, 64>}, {pipeline_mode = #tpu.pipeline_mode<synchronous>, transform_indices = @transform_5, window_bounds = array<i64: 64, 28>}, {pipeline_mode = #tpu.pipeline_mode<synchronous>, transform_indices = @transform_6, window_bounds = array<i64: 1, 28>}, {pipeline_mode = #tpu.pipeline_mode<synchronous>, transform_indices = @transform_7, window_bounds = array<i64: 28, 128>}, {pipeline_mode = #tpu.pipeline_mode<synchronous>, transform_indices = @transform_8, window_bounds = array<i64: 1, 128>}, {transform_indices = @transform_9, window_bounds = array<i64: 8, 128>}]} {
    %c0 = arith.constant 0 : index
    %c0_0 = arith.constant 0 : index
    %0 = vector.load %arg1[%c0, %c0_0] : memref<8x3072xf32, #tpu.memory_space<vmem>>, vector<8x3072xf32>
    %1 = arith.truncf %0 : vector<8x3072xf32> to vector<8x3072xbf16>
    %c0_1 = arith.constant 0 : index
    %c0_2 = arith.constant 0 : index
    %2 = vector.load %arg2[%c0_1, %c0_2] : memref<3072x256xbf16, #tpu.memory_space<vmem>>, vector<3072x256xbf16>
    %cst = arith.constant dense<0.000000e+00> : vector<8x256xf32>
    %3 = tpu.matmul %1, %2, %cst {dimension_numbers = #tpu.dot_dimension_numbers<[1], [0], [0], [1], [0, 0, 1, 1], [], []>} : vector<8x3072xbf16>, vector<3072x256xbf16>, vector<8x256xf32> -> vector<8x256xf32>
    %c0_3 = arith.constant 0 : index
    %c0_4 = arith.constant 0 : index
    %4 = vector.load %arg3[%c0_3, %c0_4] : memref<1x256xf32, #tpu.memory_space<vmem>>, vector<1x256xf32>
    %5 = vector.broadcast %4 : vector<1x256xf32> to vector<8x256xf32>
    %6 = arith.addf %3, %5 : vector<8x256xf32>
    %cst_5 = arith.constant 0.000000e+00 : f32
    %7 = vector.broadcast %cst_5 : f32 to vector<8x256xf32>
    %8 = arith.maximumf %6, %7 : vector<8x256xf32>
    %9 = arith.truncf %8 : vector<8x256xf32> to vector<8x256xbf16>
    %c0_6 = arith.constant 0 : index
    %c0_7 = arith.constant 0 : index
    %10 = vector.load %arg4[%c0_6, %c0_7] : memref<256x64xbf16, #tpu.memory_space<vmem>>, vector<256x64xbf16>
    %cst_8 = arith.constant dense<0.000000e+00> : vector<8x64xf32>
    %11 = tpu.matmul %9, %10, %cst_8 {dimension_numbers = #tpu.dot_dimension_numbers<[1], [0], [0], [1], [0, 0, 1, 1], [], []>} : vector<8x256xbf16>, vector<256x64xbf16>, vector<8x64xf32> -> vector<8x64xf32>
    %c0_9 = arith.constant 0 : index
    %c0_10 = arith.constant 0 : index
    %12 = vector.load %arg5[%c0_9, %c0_10] : memref<1x64xf32, #tpu.memory_space<vmem>>, vector<1x64xf32>
    %13 = vector.broadcast %12 : vector<1x64xf32> to vector<8x64xf32>
    %14 = arith.addf %11, %13 : vector<8x64xf32>
    %cst_11 = arith.constant 0.000000e+00 : f32
    %15 = vector.broadcast %cst_11 : f32 to vector<8x64xf32>
    %16 = arith.maximumf %14, %15 : vector<8x64xf32>
    %17 = arith.truncf %16 : vector<8x64xf32> to vector<8x64xbf16>
    %c0_12 = arith.constant 0 : index
    %c0_13 = arith.constant 0 : index
    %18 = vector.load %arg6[%c0_12, %c0_13] : memref<64x28xbf16, #tpu.memory_space<vmem>>, vector<64x28xbf16>
    %cst_14 = arith.constant dense<0.000000e+00> : vector<8x28xf32>
    %19 = tpu.matmul %17, %18, %cst_14 {dimension_numbers = #tpu.dot_dimension_numbers<[1], [0], [0], [1], [0, 0, 1, 1], [], []>} : vector<8x64xbf16>, vector<64x28xbf16>, vector<8x28xf32> -> vector<8x28xf32>
    %c0_15 = arith.constant 0 : index
    %c0_16 = arith.constant 0 : index
    %20 = vector.load %arg7[%c0_15, %c0_16] : memref<1x28xf32, #tpu.memory_space<vmem>>, vector<1x28xf32>
    %21 = vector.broadcast %20 : vector<1x28xf32> to vector<8x28xf32>
    %22 = arith.addf %19, %21 : vector<8x28xf32>
    %cst_17 = arith.constant 0.000000e+00 : f32
    %23 = vector.broadcast %cst_17 : f32 to vector<8x28xf32>
    %24 = arith.maximumf %22, %23 : vector<8x28xf32>
    %25 = arith.truncf %24 : vector<8x28xf32> to vector<8x28xbf16>
    %c0_18 = arith.constant 0 : index
    %c0_19 = arith.constant 0 : index
    %26 = vector.load %arg8[%c0_18, %c0_19] : memref<28x128xbf16, #tpu.memory_space<vmem>>, vector<28x128xbf16>
    %cst_20 = arith.constant dense<0.000000e+00> : vector<8x128xf32>
    %27 = tpu.matmul %25, %26, %cst_20 {dimension_numbers = #tpu.dot_dimension_numbers<[1], [0], [0], [1], [0, 0, 1, 1], [], []>} : vector<8x28xbf16>, vector<28x128xbf16>, vector<8x128xf32> -> vector<8x128xf32>
    %c0_21 = arith.constant 0 : index
    %c0_22 = arith.constant 0 : index
    %28 = vector.load %arg9[%c0_21, %c0_22] : memref<1x128xf32, #tpu.memory_space<vmem>>, vector<1x128xf32>
    %29 = vector.broadcast %28 : vector<1x128xf32> to vector<8x128xf32>
    %30 = arith.addf %27, %29 : vector<8x128xf32>
    %c0_23 = arith.constant 0 : index
    %c0_24 = arith.constant 0 : index
    %31 = vector.load %arg10[%c0_23, %c0_24] : memref<8x128xf32, #tpu.memory_space<vmem>>, vector<8x128xf32>
    tpu.vector_store %arg10[%c0_23, %c0_24], %30 {strides = array<i32>} : memref<8x128xf32, #tpu.memory_space<vmem>>, vector<8x128xf32>,
    return
  }
  func.func @transform_0(%arg0: i32) -> (i32, i32) {
    %c0_i32 = arith.constant 0 : i32
    %c0_i32_0 = arith.constant 0 : i32
    return %arg0, %c0_i32 : i32, i32
  }
  func.func @transform_1(%arg0: i32) -> (i32, i32) {
    %c0_i32 = arith.constant 0 : i32
    %c0_i32_0 = arith.constant 0 : i32
    %c0_i32_1 = arith.constant 0 : i32
    return %c0_i32, %c0_i32_0 : i32, i32
  }
  func.func @transform_2(%arg0: i32) -> (i32, i32) {
    %c0_i32 = arith.constant 0 : i32
    %c0_i32_0 = arith.constant 0 : i32
    %c0_i32_1 = arith.constant 0 : i32
    return %c0_i32, %c0_i32_0 : i32, i32
  }
  func.func @transform_3(%arg0: i32) -> (i32, i32) {
    %c0_i32 = arith.constant 0 : i32
    %c0_i32_0 = arith.constant 0 : i32
    %c0_i32_1 = arith.constant 0 : i32
    return %c0_i32, %c0_i32_0 : i32, i32
  }
  func.func @transform_4(%arg0: i32) -> (i32, i32) {
    %c0_i32 = arith.constant 0 : i32
    %c0_i32_0 = arith.constant 0 : i32
    %c0_i32_1 = arith.constant 0 : i32
    return %c0_i32, %c0_i32_0 : i32, i32
  }
  func.func @transform_5(%arg0: i32) -> (i32, i32) {
    %c0_i32 = arith.constant 0 : i32
    %c0_i32_0 = arith.constant 0 : i32
    %c0_i32_1 = arith.constant 0 : i32
    return %c0_i32, %c0_i32_0 : i32, i32
  }
  func.func @transform_6(%arg0: i32) -> (i32, i32) {
    %c0_i32 = arith.constant 0 : i32
    %c0_i32_0 = arith.constant 0 : i32
    %c0_i32_1 = arith.constant 0 : i32
    return %c0_i32, %c0_i32_0 : i32, i32
  }
  func.func @transform_7(%arg0: i32) -> (i32, i32) {
    %c0_i32 = arith.constant 0 : i32
    %c0_i32_0 = arith.constant 0 : i32
    %c0_i32_1 = arith.constant 0 : i32
    return %c0_i32, %c0_i32_0 : i32, i32
  }
  func.func @transform_8(%arg0: i32) -> (i32, i32) {
    %c0_i32 = arith.constant 0 : i32
    %c0_i32_0 = arith.constant 0 : i32
    %c0_i32_1 = arith.constant 0 : i32
    return %c0_i32, %c0_i32_0 : i32, i32
  }
  func.func @transform_9(%arg0: i32) -> (i32, i32) {
    %c0_i32 = arith.constant 0 : i32
    %c0_i32_0 = arith.constant 0 : i32
    return %arg0, %c0_i32 : i32, i32
  }
}

</mosaic_0001>

<llo_original>
// kernel: tpu_custom_call.1
$region0: #{tpu_custom_call.1}
  #allocation0 [shape = 'u32[]', space=smem, size = 0x4, offset = 0x4, fixed_abs, tag = 'smem constant byte address 0x4 - core index']
  #allocation1 [shape = 'u32[72,128]{1,0:T(1,128)}', space=vmem, size = 0x9000, scoped, tag = 'internal scratch']
  %s0 = inlined_call_operand.hbm [shape: f32[8,3072], index: 0, kind: input, shape index: {}]
  %s1 = inlined_call_operand.hbm [shape: bf16[3072,256], index: 1, kind: input, shape index: {}]
  %s2 = inlined_call_operand.hbm [shape: f32[1,256], index: 2, kind: input, shape index: {}]
  %s3 = inlined_call_operand.vmem [shape: bf16[256,64], index: 3, kind: input, shape index: {}]
  %s4 = inlined_call_operand.hbm [shape: f32[1,64], index: 4, kind: input, shape index: {}]
  %s5 = inlined_call_operand.vmem [shape: bf16[64,28], index: 5, kind: input, shape index: {}]
  %s6 = inlined_call_operand.hbm [shape: f32[1,28], index: 6, kind: input, shape index: {}]
  %s7 = inlined_call_operand.hbm [shape: bf16[28,128], index: 7, kind: input, shape index: {}]
  %s8 = inlined_call_operand.hbm [shape: f32[1,128], index: 8, kind: input, shape index: {}]
  %s9 = inlined_call_operand.hbm [shape: f32[8,128], index: 9, kind: output, shape index: {}]
  %s10 = sld [smem:[#allocation0]]
  $region74: #{tpu_custom_call.1} parent=0
    _
  %s12 = ssub.s32 1, %s10
  %s13 = scalar_select 0, %s12, %s10
  $region1: #{tpu_custom_call.1} parent=0
    #allocation2 [shape = 'u8[98304]{0}', space=vmem, size = 0x18000, scoped, tag = 'input window, operand 0, single buffered']
    #allocation3 [shape = 's32[1]{0}', space=sflag, size = 0x4, scoped, tag = 'scoped memory for tpu_custom_call.1']
    #allocation4 [shape = 's32[1]{0}', space=sflag, size = 0x4, scoped, tag = 'scoped memory for tpu_custom_call.1']
    #allocation5 [shape = 'u8[1572864]{0}', space=vmem, size = 0x180000, scoped, tag = 'input window, operand 1, single buffered']
    #allocation6 [shape = 's32[1]{0}', space=sflag, size = 0x4, scoped, tag = 'scoped memory for tpu_custom_call.1']
    #allocation7 [shape = 'u8[1024]{0}', space=vmem, size = 0x400, scoped, tag = 'input window, operand 2, single buffered']
    #allocation8 [shape = 'u8[512]{0}', space=vmem, size = 0x400, scoped, tag = 'input window, operand 4, single buffered']
    #allocation9 [shape = 's32[1]{0}', space=sflag, size = 0x4, scoped, tag = 'scoped memory for tpu_custom_call.1']
    #allocation10 [shape = 'u8[512]{0}', space=vmem, size = 0x400, scoped, tag = 'input window, operand 6, single buffered']
    #allocation11 [shape = 'u8[8192]{0}', space=vmem, size = 0x2000, scoped, tag = 'input window, operand 7, single buffered']
    #allocation12 [shape = 's32[1]{0}', space=sflag, size = 0x4, scoped, tag = 'scoped memory for tpu_custom_call.1']
    #allocation13 [shape = 'u8[512]{0}', space=vmem, size = 0x400, scoped, tag = 'input window, operand 8, single buffered']
    #allocation14 [shape = 'u8[4096]{0}', space=vmem, size = 0x1000, scoped, tag = 'output window, operand 0, single buffered']
    %14 = vsyncpa [#allocation3], 0
    %15 = vsyncpa [#allocation6], 0
    %16 = vsyncpa [#allocation9], 0
    %17 = vsyncpa [#allocation12], 0
    %18 = vsyncpa [#allocation4], 0
    // Predicated region
    $region2: #{tpu_custom_call.1} parent=1 // pred_check
      _
    $region3: #{tpu_custom_call.1} parent=1 // pred_check_branch
      %20 = sbr.rel (0) target = $region5
    $region4: #{tpu_custom_call.1} parent=1 // pred_region
      %22 = vsyncadd [#allocation3], 0
      %s24 = sshll.u32 %s0, 4
      %s25 = int_to_ptr.hbm [resolvable:$true] %s24
      %s26 = sshll.u32 [#allocation2], 4
      %s27 = int_to_ptr.vmem [resolvable:$true] %s26
      %29 = dma.hbm_to_vmem [thread:$0]  %s25, 3072, %s27, [#allocation3]
    $region5: #{tpu_custom_call.1} parent=1 // pred_fallthru
      _
    // Predicated region
    $region6: #{tpu_custom_call.1} parent=1 // pred_check
      _
    $region7: #{tpu_custom_call.1} parent=1 // pred_check_branch
      %31 = sbr.rel (0) target = $region9
    $region8: #{tpu_custom_call.1} parent=1 // pred_region
      %33 = vsyncadd [#allocation6], 0
      %s34 = sshll.u32 %s1, 4
      %s35 = int_to_ptr.hbm [resolvable:$true] %s34
      %s36 = sshll.u32 [#allocation5], 4
      %s37 = int_to_ptr.vmem [resolvable:$true] %s36
      %42 = dma.hbm_to_vmem [thread:$0]  %s35, 49152, %s37, [#allocation6], 128, 128, 8
    $region9: #{tpu_custom_call.1} parent=1 // pred_fallthru
      _
    // Predicated region
    $region10: #{tpu_custom_call.1} parent=1 // pred_check
      _
    $region11: #{tpu_custom_call.1} parent=1 // pred_check_branch
      %44 = sbr.rel (0) target = $region13
    $region12: #{tpu_custom_call.1} parent=1 // pred_region
      %46 = vsyncadd [#allocation6], 0
      %s48 = sshll.u32 %s2, 4
      %s49 = int_to_ptr.hbm [resolvable:$true] %s48
      %s50 = sshll.u32 [#allocation7], 4
      %s51 = int_to_ptr.vmem [resolvable:$true] %s50
      %53 = dma.hbm_to_vmem [thread:$0]  %s49, 32, %s51, [#allocation6]
    $region13: #{tpu_custom_call.1} parent=1 // pred_fallthru
      _
    // Predicated region
    $region14: #{tpu_custom_call.1} parent=1 // pred_check
      _
    $region15: #{tpu_custom_call.1} parent=1 // pred_check_branch
      %55 = sbr.rel (0) target = $region17
    $region16: #{tpu_custom_call.1} parent=1 // pred_region
      _
    $region17: #{tpu_custom_call.1} parent=1 // pred_fallthru
      _
    // Predicated region
    $region18: #{tpu_custom_call.1} parent=1 // pred_check
      _
    $region19: #{tpu_custom_call.1} parent=1 // pred_check_branch
      %57 = sbr.rel (0) target = $region21
    $region20: #{tpu_custom_call.1} parent=1 // pred_region
      %59 = vsyncadd [#allocation9], 0
      %s61 = sshll.u32 %s4, 4
      %s62 = int_to_ptr.hbm [resolvable:$true] %s61
      %s63 = sshll.u32 [#allocation8], 4
      %s64 = int_to_ptr.vmem [resolvable:$true] %s63
      %66 = dma.hbm_to_vmem [thread:$0]  %s62, 16, %s64, [#allocation9]
    $region21: #{tpu_custom_call.1} parent=1 // pred_fallthru
      _
    // Predicated region
    $region22: #{tpu_custom_call.1} parent=1 // pred_check
      _
    $region23: #{tpu_custom_call.1} parent=1 // pred_check_branch
      %68 = sbr.rel (0) target = $region25
    $region24: #{tpu_custom_call.1} parent=1 // pred_region
      _
    $region25: #{tpu_custom_call.1} parent=1 // pred_fallthru
      _
    // Predicated region
    $region26: #{tpu_custom_call.1} parent=1 // pred_check
      _
    $region27: #{tpu_custom_call.1} parent=1 // pred_check_branch
      %70 = sbr.rel (0) target = $region29
    $region28: #{tpu_custom_call.1} parent=1 // pred_region
      %72 = vsyncadd [#allocation9], 0
      %s74 = sshll.u32 %s6, 4
      %s75 = int_to_ptr.hbm [resolvable:$true] %s74
      %s76 = sshll.u32 [#allocation10], 4
      %s77 = int_to_ptr.vmem [resolvable:$true] %s76
      %79 = dma.hbm_to_vmem [thread:$0]  %s75, 16, %s77, [#allocation9]
    $region29: #{tpu_custom_call.1} parent=1 // pred_fallthru
      _
    // Predicated region
    $region30: #{tpu_custom_call.1} parent=1 // pred_check
      _
    $region31: #{tpu_custom_call.1} parent=1 // pred_check_branch
      %81 = sbr.rel (0) target = $region33
    $region32: #{tpu_custom_call.1} parent=1 // pred_region
      %83 = vsyncadd [#allocation12], 0
      %s84 = sshll.u32 %s7, 4
      %s85 = int_to_ptr.hbm [resolvable:$true] %s84
      %s86 = sshll.u32 [#allocation11], 4
      %s87 = int_to_ptr.vmem [resolvable:$true] %s86
      %92 = dma.hbm_to_vmem [thread:$0]  %s85, 256, %s87, [#allocation12], 64, 64, 4
    $region33: #{tpu_custom_call.1} parent=1 // pred_fallthru
      _
    // Predicated region
    $region34: #{tpu_custom_call.1} parent=1 // pred_check
      _
    $region35: #{tpu_custom_call.1} parent=1 // pred_check_branch
      %94 = sbr.rel (0) target = $region37
    $region36: #{tpu_custom_call.1} parent=1 // pred_region
      %96 = vsyncadd [#allocation12], 0
      %s98 = sshll.u32 %s8, 4
      %s99 = int_to_ptr.hbm [resolvable:$true] %s98
      %s100 = sshll.u32 [#allocation13], 4
      %s101 = int_to_ptr.vmem [resolvable:$true] %s100
      %103 = dma.hbm_to_vmem [thread:$0]  %s99, 16, %s101, [#allocation12]
    $region37: #{tpu_custom_call.1} parent=1 // pred_fallthru
      _
    // Predicated region
    $region38: #{tpu_custom_call.1} parent=1 // pred_check
      _
    $region39: #{tpu_custom_call.1} parent=1 // pred_check_branch
      %105 = sbr.rel (0) target = $region41
    $region40: #{tpu_custom_call.1} parent=1 // pred_region
      %107 = dma.done [#allocation3], 3072
    $region41: #{tpu_custom_call.1} parent=1 // pred_fallthru
      _
    // Predicated region
    $region42: #{tpu_custom_call.1} parent=1 // pred_check
      _
    $region43: #{tpu_custom_call.1} parent=1 // pred_check_branch
      %109 = sbr.rel (0) target = $region45
    $region44: #{tpu_custom_call.1} parent=1 // pred_region
      %111 = dma.done [#allocation6], 49152
    $region45: #{tpu_custom_call.1} parent=1 // pred_fallthru
      _
    // Predicated region
    $region46: #{tpu_custom_call.1} parent=1 // pred_check
      _
    $region47: #{tpu_custom_call.1} parent=1 // pred_check_branch
      %113 = sbr.rel (0) target = $region49
    $region48: #{tpu_custom_call.1} parent=1 // pred_region
      %115 = dma.done [#allocation6], 32
    $region49: #{tpu_custom_call.1} parent=1 // pred_fallthru
      _
    // Predicated region
    $region50: #{tpu_custom_call.1} parent=1 // pred_check
      _
    $region51: #{tpu_custom_call.1} parent=1 // pred_check_branch
      %117 = sbr.rel (0) target = $region53
    $region52: #{tpu_custom_call.1} parent=1 // pred_region
      %119 = dma.done [#allocation9], 16
    $region53: #{tpu_custom_call.1} parent=1 // pred_fallthru
      _
    // Predicated region
    $region54: #{tpu_custom_call.1} parent=1 // pred_check
      _
    $region55: #{tpu_custom_call.1} parent=1 // pred_check_branch
      %121 = sbr.rel (0) target = $region57
    $region56: #{tpu_custom_call.1} parent=1 // pred_region
      %123 = dma.done [#allocation9], 16
    $region57: #{tpu_custom_call.1} parent=1 // pred_fallthru
      _
    // Predicated region
    $region58: #{tpu_custom_call.1} parent=1 // pred_check
      _
    $region59: #{tpu_custom_call.1} parent=1 // pred_check_branch
      %125 = sbr.rel (0) target = $region61
    $region60: #{tpu_custom_call.1} parent=1 // pred_region
      %127 = dma.done [#allocation12], 256
    $region61: #{tpu_custom_call.1} parent=1 // pred_fallthru
      _
    // Predicated region
    $region62: #{tpu_custom_call.1} parent=1 // pred_check
      _
    $region63: #{tpu_custom_call.1} parent=1 // pred_check_branch
      %129 = sbr.rel (0) target = $region65
    $region64: #{tpu_custom_call.1} parent=1 // pred_region
      %131 = dma.done [#allocation12], 16
    $region65: #{tpu_custom_call.1} parent=1 // pred_fallthru
      _
    %v133 = vld [vmem:[#allocation2] sm:$0xff]
    %v134 = vld [vmem:[#allocation2 + $0x8] sm:$0xff]
    %v135 = vld [vmem:[#allocation2 + $0x10] sm:$0xff]
    %v136 = vld [vmem:[#allocation2 + $0x18] sm:$0xff]
    %v137 = vld [vmem:[#allocation2 + $0x20] sm:$0xff]
    %v138 = vld [vmem:[#allocation2 + $0x28] sm:$0xff]
    %v139 = vld [vmem:[#allocation2 + $0x30] sm:$0xff]
    %v140 = vld [vmem:[#allocation2 + $0x38] sm:$0xff]
    %v141 = vld [vmem:[#allocation2 + $0x40] sm:$0xff]
    %v142 = vld [vmem:[#allocation2 + $0x48] sm:$0xff]
    %v143 = vld [vmem:[#allocation2 + $0x50] sm:$0xff]
    %v144 = vld [vmem:[#allocation2 + $0x58] sm:$0xff]
    %v145 = vld [vmem:[#allocation2 + $0x60] sm:$0xff]
    %v146 = vld [vmem:[#allocation2 + $0x68] sm:$0xff]
    %v147 = vld [vmem:[#allocation2 + $0x70] sm:$0xff]
    %v148 = vld [vmem:[#allocation2 + $0x78] sm:$0xff]
    %v149 = vld [vmem:[#allocation2 + $0x80] sm:$0xff]
    %v150 = vld [vmem:[#allocation2 + $0x88] sm:$0xff]
    %v151 = vld [vmem:[#allocation2 + $0x90] sm:$0xff]
    %v152 = vld [vmem:[#allocation2 + $0x98] sm:$0xff]
    %v153 = vld [vmem:[#allocation2 + $0xa0] sm:$0xff]
    %v154 = vld [vmem:[#allocation2 + $0xa8] sm:$0xff]
    %v155 = vld [vmem:[#allocation2 + $0xb0] sm:$0xff]
    %v156 = vld [vmem:[#allocation2 + $0xb8] sm:$0xff]
    %v157 = vpack.c.bf16 %v133, %v133
    %v158 = vpack.c.bf16 %v134, %v134
    %v159 = vpack.c.bf16 %v135, %v135
    %v160 = vpack.c.bf16 %v136, %v136
    %v161 = vpack.c.bf16 %v137, %v137
    %v162 = vpack.c.bf16 %v138, %v138
    %v163 = vpack.c.bf16 %v139, %v139
    %v164 = vpack.c.bf16 %v140, %v140
    %v165 = vpack.c.bf16 %v141, %v141
    %v166 = vpack.c.bf16 %v142, %v142
    %v167 = vpack.c.bf16 %v143, %v143
    %v168 = vpack.c.bf16 %v144, %v144
    %v169 = vpack.c.bf16 %v145, %v145
    %v170 = vpack.c.bf16 %v146, %v146
    %v171 = vpack.c.bf16 %v147, %v147
    %v172 = vpack.c.bf16 %v148, %v148
    %v173 = vpack.c.bf16 %v149, %v149
    %v174 = vpack.c.bf16 %v150, %v150
    %v175 = vpack.c.bf16 %v151, %v151
    %v176 = vpack.c.bf16 %v152, %v152
    %v177 = vpack.c.bf16 %v153, %v153
    %v178 = vpack.c.bf16 %v154, %v154
    %v179 = vpack.c.bf16 %v155, %v155
    %v180 = vpack.c.bf16 %v156, %v156
    %v181 = vld [vmem:[#allocation5] sm:$0xff]
    %v182 = vld [vmem:[#allocation5 + $0x8] sm:$0xff]
    %v183 = vld [vmem:[#allocation5 + $0x10] sm:$0xff]
    %v184 = vld [vmem:[#allocation5 + $0x18] sm:$0xff]
    %v185 = vld [vmem:[#allocation5 + $0x20] sm:$0xff]
    %v186 = vld [vmem:[#allocation5 + $0x28] sm:$0xff]
    %v187 = vld [vmem:[#allocation5 + $0x30] sm:$0xff]
    %v188 = vld [vmem:[#allocation5 + $0x38] sm:$0xff]
    %v189 = vld [vmem:[#allocation5 + $0x40] sm:$0xff]
    %v190 = vld [vmem:[#allocation5 + $0x48] sm:$0xff]
    %v191 = vld [vmem:[#allocation5 + $0x50] sm:$0xff]
    %v192 = vld [vmem:[#allocation5 + $0x58] sm:$0xff]
    %v193 = vld [vmem:[#allocation5 + $0x60] sm:$0xff]
    %v194 = vld [vmem:[#allocation5 + $0x68] sm:$0xff]
    %v195 = vld [vmem:[#allocation5 + $0x70] sm:$0xff]
    %v196 = vld [vmem:[#allocation5 + $0x78] sm:$0xff]
    %v197 = vld [vmem:[#allocation5 + $0x80] sm:$0xff]
    %v198 = vld [vmem:[#allocation5 + $0x88] sm:$0xff]
    %v199 = vld [vmem:[#allocation5 + $0x90] sm:$0xff]
    %v200 = vld [vmem:[#allocation5 + $0x98] sm:$0xff]
    %v201 = vld [vmem:[#allocation5 + $0xa0] sm:$0xff]
    %v202 = vld [vmem:[#allocation5 + $0xa8] sm:$0xff]
    %v203 = vld [vmem:[#allocation5 + $0xb0] sm:$0xff]
    %v204 = vld [vmem:[#allocation5 + $0xb8] sm:$0xff]
    %v205 = vld [vmem:[#allocation5 + $0xc0] sm:$0xff]
    %v206 = vld [vmem:[#allocation5 + $0xc8] sm:$0xff]
    %v207 = vld [vmem:[#allocation5 + $0xd0] sm:$0xff]
    %v208 = vld [vmem:[#allocation5 + $0xd8] sm:$0xff]
    %v209 = vld [vmem:[#allocation5 + $0xe0] sm:$0xff]
    %v210 = vld [vmem:[#allocation5 + $0xe8] sm:$0xff]
    %v211 = vld [vmem:[#allocation5 + $0xf0] sm:$0xff]
    %v212 = vld [vmem:[#allocation5 + $0xf8] sm:$0xff]
    %v213 = vld [vmem:[#allocation5 + $0x100] sm:$0xff]
    %v214 = vld [vmem:[#allocation5 + $0x108] sm:$0xff]
    %v215 = vld [vmem:[#allocation5 + $0x110] sm:$0xff]
    %v216 = vld [vmem:[#allocation5 + $0x118] sm:$0xff]
    %v217 = vld [vmem:[#allocation5 + $0x120] sm:$0xff]
    %v218 = vld [vmem:[#allocation5 + $0x128] sm:$0xff]
    %v219 = vld [vmem:[#allocation5 + $0x130] sm:$0xff]
    %v220 = vld [vmem:[#allocation5 + $0x138] sm:$0xff]
    %v221 = vld [vmem:[#allocation5 + $0x140] sm:$0xff]
    %v222 = vld [vmem:[#allocation5 + $0x148] sm:$0xff]
    %v223 = vld [vmem:[#allocation5 + $0x150] sm:$0xff]
    %v224 = vld [vmem:[#allocation5 + $0x158] sm:$0xff]
    %v225 = vld [vmem:[#allocation5 + $0x160] sm:$0xff]
    %v226 = vld [vmem:[#allocation5 + $0x168] sm:$0xff]
    %v227 = vld [vmem:[#allocation5 + $0x170] sm:$0xff]
    %v228 = vld [vmem:[#allocation5 + $0x178] sm:$0xff]
    %v229 = vld [vmem:[#allocation5 + $0x180] sm:$0xff]
    %v230 = vld [vmem:[#allocation5 + $0x188] sm:$0xff]
    %v231 = vld [vmem:[#allocation5 + $0x190] sm:$0xff]
    %v232 = vld [vmem:[#allocation5 + $0x198] sm:$0xff]
    %v233 = vld [vmem:[#allocation5 + $0x1a0] sm:$0xff]
    %v234 = vld [vmem:[#allocation5 + $0x1a8] sm:$0xff]
    %v235 = vld [vmem:[#allocation5 + $0x1b0] sm:$0xff]
    %v236 = vld [vmem:[#allocation5 + $0x1b8] sm:$0xff]
    %v237 = vld [vmem:[#allocation5 + $0x1c0] sm:$0xff]
    %v238 = vld [vmem:[#allocation5 + $0x1c8] sm:$0xff]
    %v239 = vld [vmem:[#allocation5 + $0x1d0] sm:$0xff]
    %v240 = vld [vmem:[#allocation5 + $0x1d8] sm:$0xff]
    %v241 = vld [vmem:[#allocation5 + $0x1e0] sm:$0xff]
    %v242 = vld [vmem:[#allocation5 + $0x1e8] sm:$0xff]
    %v243 = vld [vmem:[#allocation5 + $0x1f0] sm:$0xff]
    %v244 = vld [vmem:[#allocation5 + $0x1f8] sm:$0xff]
    %v245 = vld [vmem:[#allocation5 + $0x200] sm:$0xff]
    %v246 = vld [vmem:[#allocation5 + $0x208] sm:$0xff]
    %v247 = vld [vmem:[#allocation5 + $0x210] sm:$0xff]
    %v248 = vld [vmem:[#allocation5 + $0x218] sm:$0xff]
    %v249 = vld [vmem:[#allocation5 + $0x220] sm:$0xff]
    %v250 = vld [vmem:[#allocation5 + $0x228] sm:$0xff]
    %v251 = vld [vmem:[#allocation5 + $0x230] sm:$0xff]
    %v252 = vld [vmem:[#allocation5 + $0x238] sm:$0xff]
    %v253 = vld [vmem:[#allocation5 + $0x240] sm:$0xff]
    %v254 = vld [vmem:[#allocation5 + $0x248] sm:$0xff]
    %v255 = vld [vmem:[#allocation5 + $0x250] sm:$0xff]
    %v256 = vld [vmem:[#allocation5 + $0x258] sm:$0xff]
    %v257 = vld [vmem:[#allocation5 + $0x260] sm:$0xff]
    %v258 = vld [vmem:[#allocation5 + $0x268] sm:$0xff]
    %v259 = vld [vmem:[#allocation5 + $0x270] sm:$0xff]
    %v260 = vld [vmem:[#allocation5 + $0x278] sm:$0xff]
    %v261 = vld [vmem:[#allocation5 + $0x280] sm:$0xff]
    %v262 = vld [vmem:[#allocation5 + $0x288] sm:$0xff]
    %v263 = vld [vmem:[#allocation5 + $0x290] sm:$0xff]
    %v264 = vld [vmem:[#allocation5 + $0x298] sm:$0xff]
    %v265 = vld [vmem:[#allocation5 + $0x2a0] sm:$0xff]
    %v266 = vld [vmem:[#allocation5 + $0x2a8] sm:$0xff]
    %v267 = vld [vmem:[#allocation5 + $0x2b0] sm:$0xff]
    %v268 = vld [vmem:[#allocation5 + $0x2b8] sm:$0xff]
    %v269 = vld [vmem:[#allocation5 + $0x2c0] sm:$0xff]
    %v270 = vld [vmem:[#allocation5 + $0x2c8] sm:$0xff]
    %v271 = vld [vmem:[#allocation5 + $0x2d0] sm:$0xff]
    %v272 = vld [vmem:[#allocation5 + $0x2d8] sm:$0xff]
    %v273 = vld [vmem:[#allocation5 + $0x2e0] sm:$0xff]
    %v274 = vld [vmem:[#allocation5 + $0x2e8] sm:$0xff]
    %v275 = vld [vmem:[#allocation5 + $0x2f0] sm:$0xff]
    %v276 = vld [vmem:[#allocation5 + $0x2f8] sm:$0xff]
    %v277 = vld [vmem:[#allocation5 + $0x300] sm:$0xff]
    %v278 = vld [vmem:[#allocation5 + $0x308] sm:$0xff]
    %v279 = vld [vmem:[#allocation5 + $0x310] sm:$0xff]
    %v280 = vld [vmem:[#allocation5 + $0x318] sm:$0xff]
    %v281 = vld [vmem:[#allocation5 + $0x320] sm:$0xff]
    %v282 = vld [vmem:[#allocation5 + $0x328] sm:$0xff]
    %v283 = vld [vmem:[#allocation5 + $0x330] sm:$0xff]
    %v284 = vld [vmem:[#allocation5 + $0x338] sm:$0xff]
    %v285 = vld [vmem:[#allocation5 + $0x340] sm:$0xff]
    %v286 = vld [vmem:[#allocation5 + $0x348] sm:$0xff]
    %v287 = vld [vmem:[#allocation5 + $0x350] sm:$0xff]
    %v288 = vld [vmem:[#allocation5 + $0x358] sm:$0xff]
    %v289 = vld [vmem:[#allocation5 + $0x360] sm:$0xff]
    %v290 = vld [vmem:[#allocation5 + $0x368] sm:$0xff]
    %v291 = vld [vmem:[#allocation5 + $0x370] sm:$0xff]
    %v292 = vld [vmem:[#allocation5 + $0x378] sm:$0xff]
    %v293 = vld [vmem:[#allocation5 + $0x380] sm:$0xff]
    %v294 = vld [vmem:[#allocation5 + $0x388] sm:$0xff]
    %v295 = vld [vmem:[#allocation5 + $0x390] sm:$0xff]
    %v296 = vld [vmem:[#allocation5 + $0x398] sm:$0xff]
    %v297 = vld [vmem:[#allocation5 + $0x3a0] sm:$0xff]
    %v298 = vld [vmem:[#allocation5 + $0x3a8] sm:$0xff]
    %v299 = vld [vmem:[#allocation5 + $0x3b0] sm:$0xff]
    %v300 = vld [vmem:[#allocation5 + $0x3b8] sm:$0xff]
    %v301 = vld [vmem:[#allocation5 + $0x3c0] sm:$0xff]
    %v302 = vld [vmem:[#allocation5 + $0x3c8] sm:$0xff]
    %v303 = vld [vmem:[#allocation5 + $0x3d0] sm:$0xff]
    %v304 = vld [vmem:[#allocation5 + $0x3d8] sm:$0xff]
    %v305 = vld [vmem:[#allocation5 + $0x3e0] sm:$0xff]
    %v306 = vld [vmem:[#allocation5 + $0x3e8] sm:$0xff]
    %v307 = vld [vmem:[#allocation5 + $0x3f0] sm:$0xff]
    %v308 = vld [vmem:[#allocation5 + $0x3f8] sm:$0xff]
    %v309 = vld [vmem:[#allocation5 + $0x400] sm:$0xff]
    %v310 = vld [vmem:[#allocation5 + $0x408] sm:$0xff]
    %v311 = vld [vmem:[#allocation5 + $0x410] sm:$0xff]
    %v312 = vld [vmem:[#allocation5 + $0x418] sm:$0xff]
    %v313 = vld [vmem:[#allocation5 + $0x420] sm:$0xff]
    %v314 = vld [vmem:[#allocation5 + $0x428] sm:$0xff]
    %v315 = vld [vmem:[#allocation5 + $0x430] sm:$0xff]
    %v316 = vld [vmem:[#allocation5 + $0x438] sm:$0xff]
    %v317 = vld [vmem:[#allocation5 + $0x440] sm:$0xff]
    %v318 = vld [vmem:[#allocation5 + $0x448] sm:$0xff]
    %v319 = vld [vmem:[#allocation5 + $0x450] sm:$0xff]
    %v320 = vld [vmem:[#allocation5 + $0x458] sm:$0xff]
    %v321 = vld [vmem:[#allocation5 + $0x460] sm:$0xff]
    %v322 = vld [vmem:[#allocation5 + $0x468] sm:$0xff]
    %v323 = vld [vmem:[#allocation5 + $0x470] sm:$0xff]
    %v324 = vld [vmem:[#allocation5 + $0x478] sm:$0xff]
    %v325 = vld [vmem:[#allocation5 + $0x480] sm:$0xff]
    %v326 = vld [vmem:[#allocation5 + $0x488] sm:$0xff]
    %v327 = vld [vmem:[#allocation5 + $0x490] sm:$0xff]
    %v328 = vld [vmem:[#allocation5 + $0x498] sm:$0xff]
    %v329 = vld [vmem:[#allocation5 + $0x4a0] sm:$0xff]
    %v330 = vld [vmem:[#allocation5 + $0x4a8] sm:$0xff]
    %v331 = vld [vmem:[#allocation5 + $0x4b0] sm:$0xff]
    %v332 = vld [vmem:[#allocation5 + $0x4b8] sm:$0xff]
    %v333 = vld [vmem:[#allocation5 + $0x4c0] sm:$0xff]
    %v334 = vld [vmem:[#allocation5 + $0x4c8] sm:$0xff]
    %v335 = vld [vmem:[#allocation5 + $0x4d0] sm:$0xff]
    %v336 = vld [vmem:[#allocation5 + $0x4d8] sm:$0xff]
    %v337 = vld [vmem:[#allocation5 + $0x4e0] sm:$0xff]
    %v338 = vld [vmem:[#allocation5 + $0x4e8] sm:$0xff]
    %v339 = vld [vmem:[#allocation5 + $0x4f0] sm:$0xff]
    %v340 = vld [vmem:[#allocation5 + $0x4f8] sm:$0xff]
    %v341 = vld [vmem:[#allocation5 + $0x500] sm:$0xff]
    %v342 = vld [vmem:[#allocation5 + $0x508] sm:$0xff]
    %v343 = vld [vmem:[#allocation5 + $0x510] sm:$0xff]
    %v344 = vld [vmem:[#allocation5 + $0x518] sm:$0xff]
    %v345 = vld [vmem:[#allocation5 + $0x520] sm:$0xff]
    %v346 = vld [vmem:[#allocation5 + $0x528] sm:$0xff]
    %v347 = vld [vmem:[#allocation5 + $0x530] sm:$0xff]
    %v348 = vld [vmem:[#allocation5 + $0x538] sm:$0xff]
    %v349 = vld [vmem:[#allocation5 + $0x540] sm:$0xff]
    %v350 = vld [vmem:[#allocation5 + $0x548] sm:$0xff]
    %v351 = vld [vmem:[#allocation5 + $0x550] sm:$0xff]
    %v352 = vld [vmem:[#allocation5 + $0x558] sm:$0xff]
    %v353 = vld [vmem:[#allocation5 + $0x560] sm:$0xff]
    %v354 = vld [vmem:[#allocation5 + $0x568] sm:$0xff]
    %v355 = vld [vmem:[#allocation5 + $0x570] sm:$0xff]
    %v356 = vld [vmem:[#allocation5 + $0x578] sm:$0xff]
    %v357 = vld [vmem:[#allocation5 + $0x580] sm:$0xff]
    %v358 = vld [vmem:[#allocation5 + $0x588] sm:$0xff]
    %v359 = vld [vmem:[#allocation5 + $0x590] sm:$0xff]
    %v360 = vld [vmem:[#allocation5 + $0x598] sm:$0xff]
    %v361 = vld [vmem:[#allocation5 + $0x5a0] sm:$0xff]
    %v362 = vld [vmem:[#allocation5 + $0x5a8] sm:$0xff]
    %v363 = vld [vmem:[#allocation5 + $0x5b0] sm:$0xff]
    %v364 = vld [vmem:[#allocation5 + $0x5b8] sm:$0xff]
    %v365 = vld [vmem:[#allocation5 + $0x5c0] sm:$0xff]
    %v366 = vld [vmem:[#allocation5 + $0x5c8] sm:$0xff]
    %v367 = vld [vmem:[#allocation5 + $0x5d0] sm:$0xff]
    %v368 = vld [vmem:[#allocation5 + $0x5d8] sm:$0xff]
    %v369 = vld [vmem:[#allocation5 + $0x5e0] sm:$0xff]
    %v370 = vld [vmem:[#allocation5 + $0x5e8] sm:$0xff]
    %v371 = vld [vmem:[#allocation5 + $0x5f0] sm:$0xff]
    %v372 = vld [vmem:[#allocation5 + $0x5f8] sm:$0xff]
    %v373 = vld [vmem:[#allocation5 + $0x600] sm:$0xff]
    %v374 = vld [vmem:[#allocation5 + $0x608] sm:$0xff]
    %v375 = vld [vmem:[#allocation5 + $0x610] sm:$0xff]
    %v376 = vld [vmem:[#allocation5 + $0x618] sm:$0xff]
    %v377 = vld [vmem:[#allocation5 + $0x620] sm:$0xff]
    %v378 = vld [vmem:[#allocation5 + $0x628] sm:$0xff]
    %v379 = vld [vmem:[#allocation5 + $0x630] sm:$0xff]
    %v380 = vld [vmem:[#allocation5 + $0x638] sm:$0xff]
    %v381 = vld [vmem:[#allocation5 + $0x640] sm:$0xff]
    %v382 = vld [vmem:[#allocation5 + $0x648] sm:$0xff]
    %v383 = vld [vmem:[#allocation5 + $0x650] sm:$0xff]
    %v384 = vld [vmem:[#allocation5 + $0x658] sm:$0xff]
    %v385 = vld [vmem:[#allocation5 + $0x660] sm:$0xff]
    %v386 = vld [vmem:[#allocation5 + $0x668] sm:$0xff]
    %v387 = vld [vmem:[#allocation5 + $0x670] sm:$0xff]
    %v388 = vld [vmem:[#allocation5 + $0x678] sm:$0xff]
    %v389 = vld [vmem:[#allocation5 + $0x680] sm:$0xff]
    %v390 = vld [vmem:[#allocation5 + $0x688] sm:$0xff]
    %v391 = vld [vmem:[#allocation5 + $0x690] sm:$0xff]
    %v392 = vld [vmem:[#allocation5 + $0x698] sm:$0xff]
    %v393 = vld [vmem:[#allocation5 + $0x6a0] sm:$0xff]
    %v394 = vld [vmem:[#allocation5 + $0x6a8] sm:$0xff]
    %v395 = vld [vmem:[#allocation5 + $0x6b0] sm:$0xff]
    %v396 = vld [vmem:[#allocation5 + $0x6b8] sm:$0xff]
    %v397 = vld [vmem:[#allocation5 + $0x6c0] sm:$0xff]
    %v398 = vld [vmem:[#allocation5 + $0x6c8] sm:$0xff]
    %v399 = vld [vmem:[#allocation5 + $0x6d0] sm:$0xff]
    %v400 = vld [vmem:[#allocation5 + $0x6d8] sm:$0xff]
    %v401 = vld [vmem:[#allocation5 + $0x6e0] sm:$0xff]
    %v402 = vld [vmem:[#allocation5 + $0x6e8] sm:$0xff]
    %v403 = vld [vmem:[#allocation5 + $0x6f0] sm:$0xff]
    %v404 = vld [vmem:[#allocation5 + $0x6f8] sm:$0xff]
    %v405 = vld [vmem:[#allocation5 + $0x700] sm:$0xff]
    %v406 = vld [vmem:[#allocation5 + $0x708] sm:$0xff]
    %v407 = vld [vmem:[#allocation5 + $0x710] sm:$0xff]
    %v408 = vld [vmem:[#allocation5 + $0x718] sm:$0xff]
    %v409 = vld [vmem:[#allocation5 + $0x720] sm:$0xff]
    %v410 = vld [vmem:[#allocation5 + $0x728] sm:$0xff]
    %v411 = vld [vmem:[#allocation5 + $0x730] sm:$0xff]
    %v412 = vld [vmem:[#allocation5 + $0x738] sm:$0xff]
    %v413 = vld [vmem:[#allocation5 + $0x740] sm:$0xff]
    %v414 = vld [vmem:[#allocation5 + $0x748] sm:$0xff]
    %v415 = vld [vmem:[#allocation5 + $0x750] sm:$0xff]
    %v416 = vld [vmem:[#allocation5 + $0x758] sm:$0xff]
    %v417 = vld [vmem:[#allocation5 + $0x760] sm:$0xff]
    %v418 = vld [vmem:[#allocation5 + $0x768] sm:$0xff]
    %v419 = vld [vmem:[#allocation5 + $0x770] sm:$0xff]
    %v420 = vld [vmem:[#allocation5 + $0x778] sm:$0xff]
    %v421 = vld [vmem:[#allocation5 + $0x780] sm:$0xff]
    %v422 = vld [vmem:[#allocation5 + $0x788] sm:$0xff]
    %v423 = vld [vmem:[#allocation5 + $0x790] sm:$0xff]
    %v424 = vld [vmem:[#allocation5 + $0x798] sm:$0xff]
    %v425 = vld [vmem:[#allocation5 + $0x7a0] sm:$0xff]
    %v426 = vld [vmem:[#allocation5 + $0x7a8] sm:$0xff]
    %v427 = vld [vmem:[#allocation5 + $0x7b0] sm:$0xff]
    %v428 = vld [vmem:[#allocation5 + $0x7b8] sm:$0xff]
    %v429 = vld [vmem:[#allocation5 + $0x7c0] sm:$0xff]
    %v430 = vld [vmem:[#allocation5 + $0x7c8] sm:$0xff]
    %v431 = vld [vmem:[#allocation5 + $0x7d0] sm:$0xff]
    %v432 = vld [vmem:[#allocation5 + $0x7d8] sm:$0xff]
    %v433 = vld [vmem:[#allocation5 + $0x7e0] sm:$0xff]
    %v434 = vld [vmem:[#allocation5 + $0x7e8] sm:$0xff]
    %v435 = vld [vmem:[#allocation5 + $0x7f0] sm:$0xff]
    %v436 = vld [vmem:[#allocation5 + $0x7f8] sm:$0xff]
    %v437 = vld [vmem:[#allocation5 + $0x800] sm:$0xff]
    %v438 = vld [vmem:[#allocation5 + $0x808] sm:$0xff]
    %v439 = vld [vmem:[#allocation5 + $0x810] sm:$0xff]
    %v440 = vld [vmem:[#allocation5 + $0x818] sm:$0xff]
    %v441 = vld [vmem:[#allocation5 + $0x820] sm:$0xff]
    %v442 = vld [vmem:[#allocation5 + $0x828] sm:$0xff]
    %v443 = vld [vmem:[#allocation5 + $0x830] sm:$0xff]
    %v444 = vld [vmem:[#allocation5 + $0x838] sm:$0xff]
    %v445 = vld [vmem:[#allocation5 + $0x840] sm:$0xff]
    %v446 = vld [vmem:[#allocation5 + $0x848] sm:$0xff]
    %v447 = vld [vmem:[#allocation5 + $0x850] sm:$0xff]
    %v448 = vld [vmem:[#allocation5 + $0x858] sm:$0xff]
    %v449 = vld [vmem:[#allocation5 + $0x860] sm:$0xff]
    %v450 = vld [vmem:[#allocation5 + $0x868] sm:$0xff]
    %v451 = vld [vmem:[#allocation5 + $0x870] sm:$0xff]
    %v452 = vld [vmem:[#allocation5 + $0x878] sm:$0xff]
    %v453 = vld [vmem:[#allocation5 + $0x880] sm:$0xff]
    %v454 = vld [vmem:[#allocation5 + $0x888] sm:$0xff]
    %v455 = vld [vmem:[#allocation5 + $0x890] sm:$0xff]
    %v456 = vld [vmem:[#allocation5 + $0x898] sm:$0xff]
    %v457 = vld [vmem:[#allocation5 + $0x8a0] sm:$0xff]
    %v458 = vld [vmem:[#allocation5 + $0x8a8] sm:$0xff]
    %v459 = vld [vmem:[#allocation5 + $0x8b0] sm:$0xff]
    %v460 = vld [vmem:[#allocation5 + $0x8b8] sm:$0xff]
    %v461 = vld [vmem:[#allocation5 + $0x8c0] sm:$0xff]
    %v462 = vld [vmem:[#allocation5 + $0x8c8] sm:$0xff]
    %v463 = vld [vmem:[#allocation5 + $0x8d0] sm:$0xff]
    %v464 = vld [vmem:[#allocation5 + $0x8d8] sm:$0xff]
    %v465 = vld [vmem:[#allocation5 + $0x8e0] sm:$0xff]
    %v466 = vld [vmem:[#allocation5 + $0x8e8] sm:$0xff]
    %v467 = vld [vmem:[#allocation5 + $0x8f0] sm:$0xff]
    %v468 = vld [vmem:[#allocation5 + $0x8f8] sm:$0xff]
    %v469 = vld [vmem:[#allocation5 + $0x900] sm:$0xff]
    %v470 = vld [vmem:[#allocation5 + $0x908] sm:$0xff]
    %v471 = vld [vmem:[#allocation5 + $0x910] sm:$0xff]
    %v472 = vld [vmem:[#allocation5 + $0x918] sm:$0xff]
    %v473 = vld [vmem:[#allocation5 + $0x920] sm:$0xff]
    %v474 = vld [vmem:[#allocation5 + $0x928] sm:$0xff]
    %v475 = vld [vmem:[#allocation5 + $0x930] sm:$0xff]
    %v476 = vld [vmem:[#allocation5 + $0x938] sm:$0xff]
    %v477 = vld [vmem:[#allocation5 + $0x940] sm:$0xff]
    %v478 = vld [vmem:[#allocation5 + $0x948] sm:$0xff]
    %v479 = vld [vmem:[#allocation5 + $0x950] sm:$0xff]
    %v480 = vld [vmem:[#allocation5 + $0x958] sm:$0xff]
    %v481 = vld [vmem:[#allocation5 + $0x960] sm:$0xff]
    %v482 = vld [vmem:[#allocation5 + $0x968] sm:$0xff]
    %v483 = vld [vmem:[#allocation5 + $0x970] sm:$0xff]
    %v484 = vld [vmem:[#allocation5 + $0x978] sm:$0xff]
    %v485 = vld [vmem:[#allocation5 + $0x980] sm:$0xff]
    %v486 = vld [vmem:[#allocation5 + $0x988] sm:$0xff]
    %v487 = vld [vmem:[#allocation5 + $0x990] sm:$0xff]
    %v488 = vld [vmem:[#allocation5 + $0x998] sm:$0xff]
    %v489 = vld [vmem:[#allocation5 + $0x9a0] sm:$0xff]
    %v490 = vld [vmem:[#allocation5 + $0x9a8] sm:$0xff]
    %v491 = vld [vmem:[#allocation5 + $0x9b0] sm:$0xff]
    %v492 = vld [vmem:[#allocation5 + $0x9b8] sm:$0xff]
    %v493 = vld [vmem:[#allocation5 + $0x9c0] sm:$0xff]
    %v494 = vld [vmem:[#allocation5 + $0x9c8] sm:$0xff]
    %v495 = vld [vmem:[#allocation5 + $0x9d0] sm:$0xff]
    %v496 = vld [vmem:[#allocation5 + $0x9d8] sm:$0xff]
    %v497 = vld [vmem:[#allocation5 + $0x9e0] sm:$0xff]
    %v498 = vld [vmem:[#allocation5 + $0x9e8] sm:$0xff]
    %v499 = vld [vmem:[#allocation5 + $0x9f0] sm:$0xff]
    %v500 = vld [vmem:[#allocation5 + $0x9f8] sm:$0xff]
    %v501 = vld [vmem:[#allocation5 + $0xa00] sm:$0xff]
    %v502 = vld [vmem:[#allocation5 + $0xa08] sm:$0xff]
    %v503 = vld [vmem:[#allocation5 + $0xa10] sm:$0xff]
    %v504 = vld [vmem:[#allocation5 + $0xa18] sm:$0xff]
    %v505 = vld [vmem:[#allocation5 + $0xa20] sm:$0xff]
    %v506 = vld [vmem:[#allocation5 + $0xa28] sm:$0xff]
    %v507 = vld [vmem:[#allocation5 + $0xa30] sm:$0xff]
    %v508 = vld [vmem:[#allocation5 + $0xa38] sm:$0xff]
    %v509 = vld [vmem:[#allocation5 + $0xa40] sm:$0xff]
    %v510 = vld [vmem:[#allocation5 + $0xa48] sm:$0xff]
    %v511 = vld [vmem:[#allocation5 + $0xa50] sm:$0xff]
    %v512 = vld [vmem:[#allocation5 + $0xa58] sm:$0xff]
    %v513 = vld [vmem:[#allocation5 + $0xa60] sm:$0xff]
    %v514 = vld [vmem:[#allocation5 + $0xa68] sm:$0xff]
    %v515 = vld [vmem:[#allocation5 + $0xa70] sm:$0xff]
    %v516 = vld [vmem:[#allocation5 + $0xa78] sm:$0xff]
    %v517 = vld [vmem:[#allocation5 + $0xa80] sm:$0xff]
    %v518 = vld [vmem:[#allocation5 + $0xa88] sm:$0xff]
    %v519 = vld [vmem:[#allocation5 + $0xa90] sm:$0xff]
    %v520 = vld [vmem:[#allocation5 + $0xa98] sm:$0xff]
    %v521 = vld [vmem:[#allocation5 + $0xaa0] sm:$0xff]
    %v522 = vld [vmem:[#allocation5 + $0xaa8] sm:$0xff]
    %v523 = vld [vmem:[#allocation5 + $0xab0] sm:$0xff]
    %v524 = vld [vmem:[#allocation5 + $0xab8] sm:$0xff]
    %v525 = vld [vmem:[#allocation5 + $0xac0] sm:$0xff]
    %v526 = vld [vmem:[#allocation5 + $0xac8] sm:$0xff]
    %v527 = vld [vmem:[#allocation5 + $0xad0] sm:$0xff]
    %v528 = vld [vmem:[#allocation5 + $0xad8] sm:$0xff]
    %v529 = vld [vmem:[#allocation5 + $0xae0] sm:$0xff]
    %v530 = vld [vmem:[#allocation5 + $0xae8] sm:$0xff]
    %v531 = vld [vmem:[#allocation5 + $0xaf0] sm:$0xff]
    %v532 = vld [vmem:[#allocation5 + $0xaf8] sm:$0xff]
    %v533 = vld [vmem:[#allocation5 + $0xb00] sm:$0xff]
    %v534 = vld [vmem:[#allocation5 + $0xb08] sm:$0xff]
    %v535 = vld [vmem:[#allocation5 + $0xb10] sm:$0xff]
    %v536 = vld [vmem:[#allocation5 + $0xb18] sm:$0xff]
    %v537 = vld [vmem:[#allocation5 + $0xb20] sm:$0xff]
    %v538 = vld [vmem:[#allocation5 + $0xb28] sm:$0xff]
    %v539 = vld [vmem:[#allocation5 + $0xb30] sm:$0xff]
    %v540 = vld [vmem:[#allocation5 + $0xb38] sm:$0xff]
    %v541 = vld [vmem:[#allocation5 + $0xb40] sm:$0xff]
    %v542 = vld [vmem:[#allocation5 + $0xb48] sm:$0xff]
    %v543 = vld [vmem:[#allocation5 + $0xb50] sm:$0xff]
    %v544 = vld [vmem:[#allocation5 + $0xb58] sm:$0xff]
    %v545 = vld [vmem:[#allocation5 + $0xb60] sm:$0xff]
    %v546 = vld [vmem:[#allocation5 + $0xb68] sm:$0xff]
    %v547 = vld [vmem:[#allocation5 + $0xb70] sm:$0xff]
    %v548 = vld [vmem:[#allocation5 + $0xb78] sm:$0xff]
    %v549 = vld [vmem:[#allocation5 + $0xb80] sm:$0xff]
    %v550 = vld [vmem:[#allocation5 + $0xb88] sm:$0xff]
    %v551 = vld [vmem:[#allocation5 + $0xb90] sm:$0xff]
    %v552 = vld [vmem:[#allocation5 + $0xb98] sm:$0xff]
    %v553 = vld [vmem:[#allocation5 + $0xba0] sm:$0xff]
    %v554 = vld [vmem:[#allocation5 + $0xba8] sm:$0xff]
    %v555 = vld [vmem:[#allocation5 + $0xbb0] sm:$0xff]
    %v556 = vld [vmem:[#allocation5 + $0xbb8] sm:$0xff]
    %v557 = vld [vmem:[#allocation5 + $0xbc0] sm:$0xff]
    %v558 = vld [vmem:[#allocation5 + $0xbc8] sm:$0xff]
    %v559 = vld [vmem:[#allocation5 + $0xbd0] sm:$0xff]
    %v560 = vld [vmem:[#allocation5 + $0xbd8] sm:$0xff]
    %v561 = vld [vmem:[#allocation5 + $0xbe0] sm:$0xff]
    %v562 = vld [vmem:[#allocation5 + $0xbe8] sm:$0xff]
    %v563 = vld [vmem:[#allocation5 + $0xbf0] sm:$0xff]
    %v564 = vld [vmem:[#allocation5 + $0xbf8] sm:$0xff]
    %v565 = vld [vmem:[#allocation7] sm:$0x3]
    %v567 = vperm.slane %v565, 0
    %v568 = vperm.slane %v565, 1
    %v955 = vunpack.c.l.b16 %v181
    %v956 = vunpack.c.h.b16 %v181
    %v957 = vunpack.c.l.b16 %v182
    %v958 = vunpack.c.h.b16 %v182
    %v959 = vunpack.c.l.b16 %v183
    %v960 = vunpack.c.h.b16 %v183
    %v961 = vunpack.c.l.b16 %v184
    %v962 = vunpack.c.h.b16 %v184
    %v963 = vunpack.c.l.b16 %v185
    %v964 = vunpack.c.h.b16 %v185
    %v965 = vunpack.c.l.b16 %v186
    %v966 = vunpack.c.h.b16 %v186
    %v967 = vunpack.c.l.b16 %v187
    %v968 = vunpack.c.h.b16 %v187
    %v969 = vunpack.c.l.b16 %v188
    %v970 = vunpack.c.h.b16 %v188
    %v971 = vunpack.c.l.b16 %v189
    %v972 = vunpack.c.h.b16 %v189
    %v973 = vunpack.c.l.b16 %v190
    %v974 = vunpack.c.h.b16 %v190
    %v975 = vunpack.c.l.b16 %v191
    %v976 = vunpack.c.h.b16 %v191
    %v977 = vunpack.c.l.b16 %v192
    %v978 = vunpack.c.h.b16 %v192
    %v979 = vunpack.c.l.b16 %v193
    %v980 = vunpack.c.h.b16 %v193
    %v981 = vunpack.c.l.b16 %v194
    %v982 = vunpack.c.h.b16 %v194
    %v983 = vunpack.c.l.b16 %v195
    %v984 = vunpack.c.h.b16 %v195
    %v985 = vunpack.c.l.b16 %v196
    %v986 = vunpack.c.h.b16 %v196
    %v987 = vunpack.c.l.b16 %v197
    %v988 = vunpack.c.h.b16 %v197
    %v989 = vunpack.c.l.b16 %v198
    %v990 = vunpack.c.h.b16 %v198
    %v991 = vunpack.c.l.b16 %v199
    %v992 = vunpack.c.h.b16 %v199
    %v993 = vunpack.c.l.b16 %v200
    %v994 = vunpack.c.h.b16 %v200
    %v995 = vunpack.c.l.b16 %v201
    %v996 = vunpack.c.h.b16 %v201
    %v997 = vunpack.c.l.b16 %v202
    %v998 = vunpack.c.h.b16 %v202
    %v999 = vunpack.c.l.b16 %v203
    %v1000 = vunpack.c.h.b16 %v203
    %v1001 = vunpack.c.l.b16 %v204
    %v1002 = vunpack.c.h.b16 %v204
    %v1003 = vunpack.c.l.b16 %v205
    %v1004 = vunpack.c.h.b16 %v205
    %v1005 = vunpack.c.l.b16 %v206
    %v1006 = vunpack.c.h.b16 %v206
    %v1007 = vunpack.c.l.b16 %v207
    %v1008 = vunpack.c.h.b16 %v207
    %v1009 = vunpack.c.l.b16 %v208
    %v1010 = vunpack.c.h.b16 %v208
    %v1011 = vunpack.c.l.b16 %v209
    %v1012 = vunpack.c.h.b16 %v209
    %v1013 = vunpack.c.l.b16 %v210
    %v1014 = vunpack.c.h.b16 %v210
    %v1015 = vunpack.c.l.b16 %v211
    %v1016 = vunpack.c.h.b16 %v211
    %v1017 = vunpack.c.l.b16 %v212
    %v1018 = vunpack.c.h.b16 %v212
    %v1019 = vunpack.c.l.b16 %v213
    %v1020 = vunpack.c.h.b16 %v213
    %v1021 = vunpack.c.l.b16 %v214
    %v1022 = vunpack.c.h.b16 %v214
    %v1023 = vunpack.c.l.b16 %v215
    %v1024 = vunpack.c.h.b16 %v215
    %v1025 = vunpack.c.l.b16 %v216
    %v1026 = vunpack.c.h.b16 %v216
    %v1027 = vunpack.c.l.b16 %v217
    %v1028 = vunpack.c.h.b16 %v217
    %v1029 = vunpack.c.l.b16 %v218
    %v1030 = vunpack.c.h.b16 %v218
    %v1031 = vunpack.c.l.b16 %v219
    %v1032 = vunpack.c.h.b16 %v219
    %v1033 = vunpack.c.l.b16 %v220
    %v1034 = vunpack.c.h.b16 %v220
    %v1035 = vunpack.c.l.b16 %v221
    %v1036 = vunpack.c.h.b16 %v221
    %v1037 = vunpack.c.l.b16 %v222
    %v1038 = vunpack.c.h.b16 %v222
    %v1039 = vunpack.c.l.b16 %v223
    %v1040 = vunpack.c.h.b16 %v223
    %v1041 = vunpack.c.l.b16 %v224
    %v1042 = vunpack.c.h.b16 %v224
    %v1043 = vunpack.c.l.b16 %v225
    %v1044 = vunpack.c.h.b16 %v225
    %v1045 = vunpack.c.l.b16 %v226
    %v1046 = vunpack.c.h.b16 %v226
    %v1047 = vunpack.c.l.b16 %v227
    %v1048 = vunpack.c.h.b16 %v227
    %v1049 = vunpack.c.l.b16 %v228
    %v1050 = vunpack.c.h.b16 %v228
    %v1051 = vunpack.c.l.b16 %v229
    %v1052 = vunpack.c.h.b16 %v229
    %v1053 = vunpack.c.l.b16 %v230
    %v1054 = vunpack.c.h.b16 %v230
    %v1055 = vunpack.c.l.b16 %v231
    %v1056 = vunpack.c.h.b16 %v231
    %v1057 = vunpack.c.l.b16 %v232
    %v1058 = vunpack.c.h.b16 %v232
    %v1059 = vunpack.c.l.b16 %v233
    %v1060 = vunpack.c.h.b16 %v233
    %v1061 = vunpack.c.l.b16 %v234
    %v1062 = vunpack.c.h.b16 %v234
    %v1063 = vunpack.c.l.b16 %v235
    %v1064 = vunpack.c.h.b16 %v235
    %v1065 = vunpack.c.l.b16 %v236
    %v1066 = vunpack.c.h.b16 %v236
    %v1067 = vunpack.c.l.b16 %v237
    %v1068 = vunpack.c.h.b16 %v237
    %v1069 = vunpack.c.l.b16 %v238
    %v1070 = vunpack.c.h.b16 %v238
    %v1071 = vunpack.c.l.b16 %v239
    %v1072 = vunpack.c.h.b16 %v239
    %v1073 = vunpack.c.l.b16 %v240
    %v1074 = vunpack.c.h.b16 %v240
    %v1075 = vunpack.c.l.b16 %v241
    %v1076 = vunpack.c.h.b16 %v241
    %v1077 = vunpack.c.l.b16 %v242
    %v1078 = vunpack.c.h.b16 %v242
    %v1079 = vunpack.c.l.b16 %v243
    %v1080 = vunpack.c.h.b16 %v243
    %v1081 = vunpack.c.l.b16 %v244
    %v1082 = vunpack.c.h.b16 %v244
    %v1083 = vunpack.c.l.b16 %v245
    %v1084 = vunpack.c.h.b16 %v245
    %v1085 = vunpack.c.l.b16 %v246
    %v1086 = vunpack.c.h.b16 %v246
    %v1087 = vunpack.c.l.b16 %v247
    %v1088 = vunpack.c.h.b16 %v247
    %v1089 = vunpack.c.l.b16 %v248
    %v1090 = vunpack.c.h.b16 %v248
    %v1091 = vunpack.c.l.b16 %v249
    %v1092 = vunpack.c.h.b16 %v249
    %v1093 = vunpack.c.l.b16 %v250
    %v1094 = vunpack.c.h.b16 %v250
    %v1095 = vunpack.c.l.b16 %v251
    %v1096 = vunpack.c.h.b16 %v251
    %v1097 = vunpack.c.l.b16 %v252
    %v1098 = vunpack.c.h.b16 %v252
    %v1099 = vunpack.c.l.b16 %v253
    %v1100 = vunpack.c.h.b16 %v253
    %v1101 = vunpack.c.l.b16 %v254
    %v1102 = vunpack.c.h.b16 %v254
    %v1103 = vunpack.c.l.b16 %v255
    %v1104 = vunpack.c.h.b16 %v255
    %v1105 = vunpack.c.l.b16 %v256
    %v1106 = vunpack.c.h.b16 %v256
    %v1107 = vunpack.c.l.b16 %v257
    %v1108 = vunpack.c.h.b16 %v257
    %v1109 = vunpack.c.l.b16 %v258
    %v1110 = vunpack.c.h.b16 %v258
    %v1111 = vunpack.c.l.b16 %v259
    %v1112 = vunpack.c.h.b16 %v259
    %v1113 = vunpack.c.l.b16 %v260
    %v1114 = vunpack.c.h.b16 %v260
    %v1115 = vunpack.c.l.b16 %v261
    %v1116 = vunpack.c.h.b16 %v261
    %v1117 = vunpack.c.l.b16 %v262
    %v1118 = vunpack.c.h.b16 %v262
    %v1119 = vunpack.c.l.b16 %v263
    %v1120 = vunpack.c.h.b16 %v263
    %v1121 = vunpack.c.l.b16 %v264
    %v1122 = vunpack.c.h.b16 %v264
    %v1123 = vunpack.c.l.b16 %v265
    %v1124 = vunpack.c.h.b16 %v265
    %v1125 = vunpack.c.l.b16 %v266
    %v1126 = vunpack.c.h.b16 %v266
    %v1127 = vunpack.c.l.b16 %v267
    %v1128 = vunpack.c.h.b16 %v267
    %v1129 = vunpack.c.l.b16 %v268
    %v1130 = vunpack.c.h.b16 %v268
    %v1131 = vunpack.c.l.b16 %v269
    %v1132 = vunpack.c.h.b16 %v269
    %v1133 = vunpack.c.l.b16 %v270
    %v1134 = vunpack.c.h.b16 %v270
    %v1135 = vunpack.c.l.b16 %v271
    %v1136 = vunpack.c.h.b16 %v271
    %v1137 = vunpack.c.l.b16 %v272
    %v1138 = vunpack.c.h.b16 %v272
    %v1139 = vunpack.c.l.b16 %v273
    %v1140 = vunpack.c.h.b16 %v273
    %v1141 = vunpack.c.l.b16 %v274
    %v1142 = vunpack.c.h.b16 %v274
    %v1143 = vunpack.c.l.b16 %v275
    %v1144 = vunpack.c.h.b16 %v275
    %v1145 = vunpack.c.l.b16 %v276
    %v1146 = vunpack.c.h.b16 %v276
    %v1147 = vunpack.c.l.b16 %v277
    %v1148 = vunpack.c.h.b16 %v277
    %v1149 = vunpack.c.l.b16 %v278
    %v1150 = vunpack.c.h.b16 %v278
    %v1151 = vunpack.c.l.b16 %v279
    %v1152 = vunpack.c.h.b16 %v279
    %v1153 = vunpack.c.l.b16 %v280
    %v1154 = vunpack.c.h.b16 %v280
    %v1155 = vunpack.c.l.b16 %v281
    %v1156 = vunpack.c.h.b16 %v281
    %v1157 = vunpack.c.l.b16 %v282
    %v1158 = vunpack.c.h.b16 %v282
    %v1159 = vunpack.c.l.b16 %v283
    %v1160 = vunpack.c.h.b16 %v283
    %v1161 = vunpack.c.l.b16 %v284
    %v1162 = vunpack.c.h.b16 %v284
    %v1163 = vunpack.c.l.b16 %v285
    %v1164 = vunpack.c.h.b16 %v285
    %v1165 = vunpack.c.l.b16 %v286
    %v1166 = vunpack.c.h.b16 %v286
    %v1167 = vunpack.c.l.b16 %v287
    %v1168 = vunpack.c.h.b16 %v287
    %v1169 = vunpack.c.l.b16 %v288
    %v1170 = vunpack.c.h.b16 %v288
    %v1171 = vunpack.c.l.b16 %v289
    %v1172 = vunpack.c.h.b16 %v289
    %v1173 = vunpack.c.l.b16 %v290
    %v1174 = vunpack.c.h.b16 %v290
    %v1175 = vunpack.c.l.b16 %v291
    %v1176 = vunpack.c.h.b16 %v291
    %v1177 = vunpack.c.l.b16 %v292
    %v1178 = vunpack.c.h.b16 %v292
    %v1179 = vunpack.c.l.b16 %v293
    %v1180 = vunpack.c.h.b16 %v293
    %v1181 = vunpack.c.l.b16 %v294
    %v1182 = vunpack.c.h.b16 %v294
    %v1183 = vunpack.c.l.b16 %v295
    %v1184 = vunpack.c.h.b16 %v295
    %v1185 = vunpack.c.l.b16 %v296
    %v1186 = vunpack.c.h.b16 %v296
    %v1187 = vunpack.c.l.b16 %v297
    %v1188 = vunpack.c.h.b16 %v297
    %v1189 = vunpack.c.l.b16 %v298
    %v1190 = vunpack.c.h.b16 %v298
    %v1191 = vunpack.c.l.b16 %v299
    %v1192 = vunpack.c.h.b16 %v299
    %v1193 = vunpack.c.l.b16 %v300
    %v1194 = vunpack.c.h.b16 %v300
    %v1195 = vunpack.c.l.b16 %v301
    %v1196 = vunpack.c.h.b16 %v301
    %v1197 = vunpack.c.l.b16 %v302
    %v1198 = vunpack.c.h.b16 %v302
    %v1199 = vunpack.c.l.b16 %v303
    %v1200 = vunpack.c.h.b16 %v303
    %v1201 = vunpack.c.l.b16 %v304
    %v1202 = vunpack.c.h.b16 %v304
    %v1203 = vunpack.c.l.b16 %v305
    %v1204 = vunpack.c.h.b16 %v305
    %v1205 = vunpack.c.l.b16 %v306
    %v1206 = vunpack.c.h.b16 %v306
    %v1207 = vunpack.c.l.b16 %v307
    %v1208 = vunpack.c.h.b16 %v307
    %v1209 = vunpack.c.l.b16 %v308
    %v1210 = vunpack.c.h.b16 %v308
    %v1211 = vunpack.c.l.b16 %v309
    %v1212 = vunpack.c.h.b16 %v309
    %v1213 = vunpack.c.l.b16 %v310
    %v1214 = vunpack.c.h.b16 %v310
    %v1215 = vunpack.c.l.b16 %v311
    %v1216 = vunpack.c.h.b16 %v311
    %v1217 = vunpack.c.l.b16 %v312
    %v1218 = vunpack.c.h.b16 %v312
    %v1219 = vunpack.c.l.b16 %v313
    %v1220 = vunpack.c.h.b16 %v313
    %v1221 = vunpack.c.l.b16 %v314
    %v1222 = vunpack.c.h.b16 %v314
    %v1223 = vunpack.c.l.b16 %v315
    %v1224 = vunpack.c.h.b16 %v315
    %v1225 = vunpack.c.l.b16 %v316
    %v1226 = vunpack.c.h.b16 %v316
    %v1227 = vunpack.c.l.b16 %v317
    %v1228 = vunpack.c.h.b16 %v317
    %v1229 = vunpack.c.l.b16 %v318
    %v1230 = vunpack.c.h.b16 %v318
    %v1231 = vunpack.c.l.b16 %v319
    %v1232 = vunpack.c.h.b16 %v319
    %v1233 = vunpack.c.l.b16 %v320
    %v1234 = vunpack.c.h.b16 %v320
    %v1235 = vunpack.c.l.b16 %v321
    %v1236 = vunpack.c.h.b16 %v321
    %v1237 = vunpack.c.l.b16 %v322
    %v1238 = vunpack.c.h.b16 %v322
    %v1239 = vunpack.c.l.b16 %v323
    %v1240 = vunpack.c.h.b16 %v323
    %v1241 = vunpack.c.l.b16 %v324
    %v1242 = vunpack.c.h.b16 %v324
    %v1243 = vunpack.c.l.b16 %v325
    %v1244 = vunpack.c.h.b16 %v325
    %v1245 = vunpack.c.l.b16 %v326
    %v1246 = vunpack.c.h.b16 %v326
    %v1247 = vunpack.c.l.b16 %v327
    %v1248 = vunpack.c.h.b16 %v327
    %v1249 = vunpack.c.l.b16 %v328
    %v1250 = vunpack.c.h.b16 %v328
    %v1251 = vunpack.c.l.b16 %v329
    %v1252 = vunpack.c.h.b16 %v329
    %v1253 = vunpack.c.l.b16 %v330
    %v1254 = vunpack.c.h.b16 %v330
    %v1255 = vunpack.c.l.b16 %v331
    %v1256 = vunpack.c.h.b16 %v331
    %v1257 = vunpack.c.l.b16 %v332
    %v1258 = vunpack.c.h.b16 %v332
    %v1259 = vunpack.c.l.b16 %v333
    %v1260 = vunpack.c.h.b16 %v333
    %v1261 = vunpack.c.l.b16 %v334
    %v1262 = vunpack.c.h.b16 %v334
    %v1263 = vunpack.c.l.b16 %v335
    %v1264 = vunpack.c.h.b16 %v335
    %v1265 = vunpack.c.l.b16 %v336
    %v1266 = vunpack.c.h.b16 %v336
    %v1267 = vunpack.c.l.b16 %v337
    %v1268 = vunpack.c.h.b16 %v337
    %v1269 = vunpack.c.l.b16 %v338
    %v1270 = vunpack.c.h.b16 %v338
    %v1271 = vunpack.c.l.b16 %v339
    %v1272 = vunpack.c.h.b16 %v339
    %v1273 = vunpack.c.l.b16 %v340
    %v1274 = vunpack.c.h.b16 %v340
    %v1275 = vunpack.c.l.b16 %v341
    %v1276 = vunpack.c.h.b16 %v341
    %v1277 = vunpack.c.l.b16 %v342
    %v1278 = vunpack.c.h.b16 %v342
    %v1279 = vunpack.c.l.b16 %v343
    %v1280 = vunpack.c.h.b16 %v343
    %v1281 = vunpack.c.l.b16 %v344
    %v1282 = vunpack.c.h.b16 %v344
    %v1283 = vunpack.c.l.b16 %v345
    %v1284 = vunpack.c.h.b16 %v345
    %v1285 = vunpack.c.l.b16 %v346
    %v1286 = vunpack.c.h.b16 %v346
    %v1287 = vunpack.c.l.b16 %v347
    %v1288 = vunpack.c.h.b16 %v347
    %v1289 = vunpack.c.l.b16 %v348
    %v1290 = vunpack.c.h.b16 %v348
    %v1291 = vunpack.c.l.b16 %v349
    %v1292 = vunpack.c.h.b16 %v349
    %v1293 = vunpack.c.l.b16 %v350
    %v1294 = vunpack.c.h.b16 %v350
    %v1295 = vunpack.c.l.b16 %v351
    %v1296 = vunpack.c.h.b16 %v351
    %v1297 = vunpack.c.l.b16 %v352
    %v1298 = vunpack.c.h.b16 %v352
    %v1299 = vunpack.c.l.b16 %v353
    %v1300 = vunpack.c.h.b16 %v353
    %v1301 = vunpack.c.l.b16 %v354
    %v1302 = vunpack.c.h.b16 %v354
    %v1303 = vunpack.c.l.b16 %v355
    %v1304 = vunpack.c.h.b16 %v355
    %v1305 = vunpack.c.l.b16 %v356
    %v1306 = vunpack.c.h.b16 %v356
    %v1307 = vunpack.c.l.b16 %v357
    %v1308 = vunpack.c.h.b16 %v357
    %v1309 = vunpack.c.l.b16 %v358
    %v1310 = vunpack.c.h.b16 %v358
    %v1311 = vunpack.c.l.b16 %v359
    %v1312 = vunpack.c.h.b16 %v359
    %v1313 = vunpack.c.l.b16 %v360
    %v1314 = vunpack.c.h.b16 %v360
    %v1315 = vunpack.c.l.b16 %v361
    %v1316 = vunpack.c.h.b16 %v361
    %v1317 = vunpack.c.l.b16 %v362
    %v1318 = vunpack.c.h.b16 %v362
    %v1319 = vunpack.c.l.b16 %v363
    %v1320 = vunpack.c.h.b16 %v363
    %v1321 = vunpack.c.l.b16 %v364
    %v1322 = vunpack.c.h.b16 %v364
    %v1323 = vunpack.c.l.b16 %v365
    %v1324 = vunpack.c.h.b16 %v365
    %v1325 = vunpack.c.l.b16 %v366
    %v1326 = vunpack.c.h.b16 %v366
    %v1327 = vunpack.c.l.b16 %v367
    %v1328 = vunpack.c.h.b16 %v367
    %v1329 = vunpack.c.l.b16 %v368
    %v1330 = vunpack.c.h.b16 %v368
    %v1331 = vunpack.c.l.b16 %v369
    %v1332 = vunpack.c.h.b16 %v369
    %v1333 = vunpack.c.l.b16 %v370
    %v1334 = vunpack.c.h.b16 %v370
    %v1335 = vunpack.c.l.b16 %v371
    %v1336 = vunpack.c.h.b16 %v371
    %v1337 = vunpack.c.l.b16 %v372
    %v1338 = vunpack.c.h.b16 %v372
    %v1339 = vunpack.c.l.b16 %v373
    %v1340 = vunpack.c.h.b16 %v373
    %v1341 = vunpack.c.l.b16 %v374
    %v1342 = vunpack.c.h.b16 %v374
    %v1343 = vunpack.c.l.b16 %v375
    %v1344 = vunpack.c.h.b16 %v375
    %v1345 = vunpack.c.l.b16 %v376
    %v1346 = vunpack.c.h.b16 %v376
    %v1347 = vunpack.c.l.b16 %v377
    %v1348 = vunpack.c.h.b16 %v377
    %v1349 = vunpack.c.l.b16 %v378
    %v1350 = vunpack.c.h.b16 %v378
    %v1351 = vunpack.c.l.b16 %v379
    %v1352 = vunpack.c.h.b16 %v379
    %v1353 = vunpack.c.l.b16 %v380
    %v1354 = vunpack.c.h.b16 %v380
    %v1355 = vunpack.c.l.b16 %v381
    %v1356 = vunpack.c.h.b16 %v381
    %v1357 = vunpack.c.l.b16 %v382
    %v1358 = vunpack.c.h.b16 %v382
    %v1359 = vunpack.c.l.b16 %v383
    %v1360 = vunpack.c.h.b16 %v383
    %v1361 = vunpack.c.l.b16 %v384
    %v1362 = vunpack.c.h.b16 %v384
    %v1363 = vunpack.c.l.b16 %v385
    %v1364 = vunpack.c.h.b16 %v385
    %v1365 = vunpack.c.l.b16 %v386
    %v1366 = vunpack.c.h.b16 %v386
    %v1367 = vunpack.c.l.b16 %v387
    %v1368 = vunpack.c.h.b16 %v387
    %v1369 = vunpack.c.l.b16 %v388
    %v1370 = vunpack.c.h.b16 %v388
    %v1371 = vunpack.c.l.b16 %v389
    %v1372 = vunpack.c.h.b16 %v389
    %v1373 = vunpack.c.l.b16 %v390
    %v1374 = vunpack.c.h.b16 %v390
    %v1375 = vunpack.c.l.b16 %v391
    %v1376 = vunpack.c.h.b16 %v391
    %v1377 = vunpack.c.l.b16 %v392
    %v1378 = vunpack.c.h.b16 %v392
    %v1379 = vunpack.c.l.b16 %v393
    %v1380 = vunpack.c.h.b16 %v393
    %v1381 = vunpack.c.l.b16 %v394
    %v1382 = vunpack.c.h.b16 %v394
    %v1383 = vunpack.c.l.b16 %v395
    %v1384 = vunpack.c.h.b16 %v395
    %v1385 = vunpack.c.l.b16 %v396
    %v1386 = vunpack.c.h.b16 %v396
    %v1387 = vunpack.c.l.b16 %v397
    %v1388 = vunpack.c.h.b16 %v397
    %v1389 = vunpack.c.l.b16 %v398
    %v1390 = vunpack.c.h.b16 %v398
    %v1391 = vunpack.c.l.b16 %v399
    %v1392 = vunpack.c.h.b16 %v399
    %v1393 = vunpack.c.l.b16 %v400
    %v1394 = vunpack.c.h.b16 %v400
    %v1395 = vunpack.c.l.b16 %v401
    %v1396 = vunpack.c.h.b16 %v401
    %v1397 = vunpack.c.l.b16 %v402
    %v1398 = vunpack.c.h.b16 %v402
    %v1399 = vunpack.c.l.b16 %v403
    %v1400 = vunpack.c.h.b16 %v403
    %v1401 = vunpack.c.l.b16 %v404
    %v1402 = vunpack.c.h.b16 %v404
    %v1403 = vunpack.c.l.b16 %v405
    %v1404 = vunpack.c.h.b16 %v405
    %v1405 = vunpack.c.l.b16 %v406
    %v1406 = vunpack.c.h.b16 %v406
    %v1407 = vunpack.c.l.b16 %v407
    %v1408 = vunpack.c.h.b16 %v407
    %v1409 = vunpack.c.l.b16 %v408
    %v1410 = vunpack.c.h.b16 %v408
    %v1411 = vunpack.c.l.b16 %v409
    %v1412 = vunpack.c.h.b16 %v409
    %v1413 = vunpack.c.l.b16 %v410
    %v1414 = vunpack.c.h.b16 %v410
    %v1415 = vunpack.c.l.b16 %v411
    %v1416 = vunpack.c.h.b16 %v411
    %v1417 = vunpack.c.l.b16 %v412
    %v1418 = vunpack.c.h.b16 %v412
    %v1419 = vunpack.c.l.b16 %v413
    %v1420 = vunpack.c.h.b16 %v413
    %v1421 = vunpack.c.l.b16 %v414
    %v1422 = vunpack.c.h.b16 %v414
    %v1423 = vunpack.c.l.b16 %v415
    %v1424 = vunpack.c.h.b16 %v415
    %v1425 = vunpack.c.l.b16 %v416
    %v1426 = vunpack.c.h.b16 %v416
    %v1427 = vunpack.c.l.b16 %v417
    %v1428 = vunpack.c.h.b16 %v417
    %v1429 = vunpack.c.l.b16 %v418
    %v1430 = vunpack.c.h.b16 %v418
    %v1431 = vunpack.c.l.b16 %v419
    %v1432 = vunpack.c.h.b16 %v419
    %v1433 = vunpack.c.l.b16 %v420
    %v1434 = vunpack.c.h.b16 %v420
    %v1435 = vunpack.c.l.b16 %v421
    %v1436 = vunpack.c.h.b16 %v421
    %v1437 = vunpack.c.l.b16 %v422
    %v1438 = vunpack.c.h.b16 %v422
    %v1439 = vunpack.c.l.b16 %v423
    %v1440 = vunpack.c.h.b16 %v423
    %v1441 = vunpack.c.l.b16 %v424
    %v1442 = vunpack.c.h.b16 %v424
    %v1443 = vunpack.c.l.b16 %v425
    %v1444 = vunpack.c.h.b16 %v425
    %v1445 = vunpack.c.l.b16 %v426
    %v1446 = vunpack.c.h.b16 %v426
    %v1447 = vunpack.c.l.b16 %v427
    %v1448 = vunpack.c.h.b16 %v427
    %v1449 = vunpack.c.l.b16 %v428
    %v1450 = vunpack.c.h.b16 %v428
    %v1451 = vunpack.c.l.b16 %v429
    %v1452 = vunpack.c.h.b16 %v429
    %v1453 = vunpack.c.l.b16 %v430
    %v1454 = vunpack.c.h.b16 %v430
    %v1455 = vunpack.c.l.b16 %v431
    %v1456 = vunpack.c.h.b16 %v431
    %v1457 = vunpack.c.l.b16 %v432
    %v1458 = vunpack.c.h.b16 %v432
    %v1459 = vunpack.c.l.b16 %v433
    %v1460 = vunpack.c.h.b16 %v433
    %v1461 = vunpack.c.l.b16 %v434
    %v1462 = vunpack.c.h.b16 %v434
    %v1463 = vunpack.c.l.b16 %v435
    %v1464 = vunpack.c.h.b16 %v435
    %v1465 = vunpack.c.l.b16 %v436
    %v1466 = vunpack.c.h.b16 %v436
    %v1467 = vunpack.c.l.b16 %v437
    %v1468 = vunpack.c.h.b16 %v437
    %v1469 = vunpack.c.l.b16 %v438
    %v1470 = vunpack.c.h.b16 %v438
    %v1471 = vunpack.c.l.b16 %v439
    %v1472 = vunpack.c.h.b16 %v439
    %v1473 = vunpack.c.l.b16 %v440
    %v1474 = vunpack.c.h.b16 %v440
    %v1475 = vunpack.c.l.b16 %v441
    %v1476 = vunpack.c.h.b16 %v441
    %v1477 = vunpack.c.l.b16 %v442
    %v1478 = vunpack.c.h.b16 %v442
    %v1479 = vunpack.c.l.b16 %v443
    %v1480 = vunpack.c.h.b16 %v443
    %v1481 = vunpack.c.l.b16 %v444
    %v1482 = vunpack.c.h.b16 %v444
    %v1483 = vunpack.c.l.b16 %v445
    %v1484 = vunpack.c.h.b16 %v445
    %v1485 = vunpack.c.l.b16 %v446
    %v1486 = vunpack.c.h.b16 %v446
    %v1487 = vunpack.c.l.b16 %v447
    %v1488 = vunpack.c.h.b16 %v447
    %v1489 = vunpack.c.l.b16 %v448
    %v1490 = vunpack.c.h.b16 %v448
    %v1491 = vunpack.c.l.b16 %v449
    %v1492 = vunpack.c.h.b16 %v449
    %v1493 = vunpack.c.l.b16 %v450
    %v1494 = vunpack.c.h.b16 %v450
    %v1495 = vunpack.c.l.b16 %v451
    %v1496 = vunpack.c.h.b16 %v451
    %v1497 = vunpack.c.l.b16 %v452
    %v1498 = vunpack.c.h.b16 %v452
    %v1499 = vunpack.c.l.b16 %v453
    %v1500 = vunpack.c.h.b16 %v453
    %v1501 = vunpack.c.l.b16 %v454
    %v1502 = vunpack.c.h.b16 %v454
    %v1503 = vunpack.c.l.b16 %v455
    %v1504 = vunpack.c.h.b16 %v455
    %v1505 = vunpack.c.l.b16 %v456
    %v1506 = vunpack.c.h.b16 %v456
    %v1507 = vunpack.c.l.b16 %v457
    %v1508 = vunpack.c.h.b16 %v457
    %v1509 = vunpack.c.l.b16 %v458
    %v1510 = vunpack.c.h.b16 %v458
    %v1511 = vunpack.c.l.b16 %v459
    %v1512 = vunpack.c.h.b16 %v459
    %v1513 = vunpack.c.l.b16 %v460
    %v1514 = vunpack.c.h.b16 %v460
    %v1515 = vunpack.c.l.b16 %v461
    %v1516 = vunpack.c.h.b16 %v461
    %v1517 = vunpack.c.l.b16 %v462
    %v1518 = vunpack.c.h.b16 %v462
    %v1519 = vunpack.c.l.b16 %v463
    %v1520 = vunpack.c.h.b16 %v463
    %v1521 = vunpack.c.l.b16 %v464
    %v1522 = vunpack.c.h.b16 %v464
    %v1523 = vunpack.c.l.b16 %v465
    %v1524 = vunpack.c.h.b16 %v465
    %v1525 = vunpack.c.l.b16 %v466
    %v1526 = vunpack.c.h.b16 %v466
    %v1527 = vunpack.c.l.b16 %v467
    %v1528 = vunpack.c.h.b16 %v467
    %v1529 = vunpack.c.l.b16 %v468
    %v1530 = vunpack.c.h.b16 %v468
    %v1531 = vunpack.c.l.b16 %v469
    %v1532 = vunpack.c.h.b16 %v469
    %v1533 = vunpack.c.l.b16 %v470
    %v1534 = vunpack.c.h.b16 %v470
    %v1535 = vunpack.c.l.b16 %v471
    %v1536 = vunpack.c.h.b16 %v471
    %v1537 = vunpack.c.l.b16 %v472
    %v1538 = vunpack.c.h.b16 %v472
    %v1539 = vunpack.c.l.b16 %v473
    %v1540 = vunpack.c.h.b16 %v473
    %v1541 = vunpack.c.l.b16 %v474
    %v1542 = vunpack.c.h.b16 %v474
    %v1543 = vunpack.c.l.b16 %v475
    %v1544 = vunpack.c.h.b16 %v475
    %v1545 = vunpack.c.l.b16 %v476
    %v1546 = vunpack.c.h.b16 %v476
    %v1547 = vunpack.c.l.b16 %v477
    %v1548 = vunpack.c.h.b16 %v477
    %v1549 = vunpack.c.l.b16 %v478
    %v1550 = vunpack.c.h.b16 %v478
    %v1551 = vunpack.c.l.b16 %v479
    %v1552 = vunpack.c.h.b16 %v479
    %v1553 = vunpack.c.l.b16 %v480
    %v1554 = vunpack.c.h.b16 %v480
    %v1555 = vunpack.c.l.b16 %v481
    %v1556 = vunpack.c.h.b16 %v481
    %v1557 = vunpack.c.l.b16 %v482
    %v1558 = vunpack.c.h.b16 %v482
    %v1559 = vunpack.c.l.b16 %v483
    %v1560 = vunpack.c.h.b16 %v483
    %v1561 = vunpack.c.l.b16 %v484
    %v1562 = vunpack.c.h.b16 %v484
    %v1563 = vunpack.c.l.b16 %v485
    %v1564 = vunpack.c.h.b16 %v485
    %v1565 = vunpack.c.l.b16 %v486
    %v1566 = vunpack.c.h.b16 %v486
    %v1567 = vunpack.c.l.b16 %v487
    %v1568 = vunpack.c.h.b16 %v487
    %v1569 = vunpack.c.l.b16 %v488
    %v1570 = vunpack.c.h.b16 %v488
    %v1571 = vunpack.c.l.b16 %v489
    %v1572 = vunpack.c.h.b16 %v489
    %v1573 = vunpack.c.l.b16 %v490
    %v1574 = vunpack.c.h.b16 %v490
    %v1575 = vunpack.c.l.b16 %v491
    %v1576 = vunpack.c.h.b16 %v491
    %v1577 = vunpack.c.l.b16 %v492
    %v1578 = vunpack.c.h.b16 %v492
    %v1579 = vunpack.c.l.b16 %v493
    %v1580 = vunpack.c.h.b16 %v493
    %v1581 = vunpack.c.l.b16 %v494
    %v1582 = vunpack.c.h.b16 %v494
    %v1583 = vunpack.c.l.b16 %v495
    %v1584 = vunpack.c.h.b16 %v495
    %v1585 = vunpack.c.l.b16 %v496
    %v1586 = vunpack.c.h.b16 %v496
    %v1587 = vunpack.c.l.b16 %v497
    %v1588 = vunpack.c.h.b16 %v497
    %v1589 = vunpack.c.l.b16 %v498
    %v1590 = vunpack.c.h.b16 %v498
    %v1591 = vunpack.c.l.b16 %v499
    %v1592 = vunpack.c.h.b16 %v499
    %v1593 = vunpack.c.l.b16 %v500
    %v1594 = vunpack.c.h.b16 %v500
    %v1595 = vunpack.c.l.b16 %v501
    %v1596 = vunpack.c.h.b16 %v501
    %v1597 = vunpack.c.l.b16 %v502
    %v1598 = vunpack.c.h.b16 %v502
    %v1599 = vunpack.c.l.b16 %v503
    %v1600 = vunpack.c.h.b16 %v503
    %v1601 = vunpack.c.l.b16 %v504
    %v1602 = vunpack.c.h.b16 %v504
    %v1603 = vunpack.c.l.b16 %v505
    %v1604 = vunpack.c.h.b16 %v505
    %v1605 = vunpack.c.l.b16 %v506
    %v1606 = vunpack.c.h.b16 %v506
    %v1607 = vunpack.c.l.b16 %v507
    %v1608 = vunpack.c.h.b16 %v507
    %v1609 = vunpack.c.l.b16 %v508
    %v1610 = vunpack.c.h.b16 %v508
    %v1611 = vunpack.c.l.b16 %v509
    %v1612 = vunpack.c.h.b16 %v509
    %v1613 = vunpack.c.l.b16 %v510
    %v1614 = vunpack.c.h.b16 %v510
    %v1615 = vunpack.c.l.b16 %v511
    %v1616 = vunpack.c.h.b16 %v511
    %v1617 = vunpack.c.l.b16 %v512
    %v1618 = vunpack.c.h.b16 %v512
    %v1619 = vunpack.c.l.b16 %v513
    %v1620 = vunpack.c.h.b16 %v513
    %v1621 = vunpack.c.l.b16 %v514
    %v1622 = vunpack.c.h.b16 %v514
    %v1623 = vunpack.c.l.b16 %v515
    %v1624 = vunpack.c.h.b16 %v515
    %v1625 = vunpack.c.l.b16 %v516
    %v1626 = vunpack.c.h.b16 %v516
    %v1627 = vunpack.c.l.b16 %v517
    %v1628 = vunpack.c.h.b16 %v517
    %v1629 = vunpack.c.l.b16 %v518
    %v1630 = vunpack.c.h.b16 %v518
    %v1631 = vunpack.c.l.b16 %v519
    %v1632 = vunpack.c.h.b16 %v519
    %v1633 = vunpack.c.l.b16 %v520
    %v1634 = vunpack.c.h.b16 %v520
    %v1635 = vunpack.c.l.b16 %v521
    %v1636 = vunpack.c.h.b16 %v521
    %v1637 = vunpack.c.l.b16 %v522
    %v1638 = vunpack.c.h.b16 %v522
    %v1639 = vunpack.c.l.b16 %v523
    %v1640 = vunpack.c.h.b16 %v523
    %v1641 = vunpack.c.l.b16 %v524
    %v1642 = vunpack.c.h.b16 %v524
    %v1643 = vunpack.c.l.b16 %v525
    %v1644 = vunpack.c.h.b16 %v525
    %v1645 = vunpack.c.l.b16 %v526
    %v1646 = vunpack.c.h.b16 %v526
    %v1647 = vunpack.c.l.b16 %v527
    %v1648 = vunpack.c.h.b16 %v527
    %v1649 = vunpack.c.l.b16 %v528
    %v1650 = vunpack.c.h.b16 %v528
    %v1651 = vunpack.c.l.b16 %v529
    %v1652 = vunpack.c.h.b16 %v529
    %v1653 = vunpack.c.l.b16 %v530
    %v1654 = vunpack.c.h.b16 %v530
    %v1655 = vunpack.c.l.b16 %v531
    %v1656 = vunpack.c.h.b16 %v531
    %v1657 = vunpack.c.l.b16 %v532
    %v1658 = vunpack.c.h.b16 %v532
    %v1659 = vunpack.c.l.b16 %v533
    %v1660 = vunpack.c.h.b16 %v533
    %v1661 = vunpack.c.l.b16 %v534
    %v1662 = vunpack.c.h.b16 %v534
    %v1663 = vunpack.c.l.b16 %v535
    %v1664 = vunpack.c.h.b16 %v535
    %v1665 = vunpack.c.l.b16 %v536
    %v1666 = vunpack.c.h.b16 %v536
    %v1667 = vunpack.c.l.b16 %v537
    %v1668 = vunpack.c.h.b16 %v537
    %v1669 = vunpack.c.l.b16 %v538
    %v1670 = vunpack.c.h.b16 %v538
    %v1671 = vunpack.c.l.b16 %v539
    %v1672 = vunpack.c.h.b16 %v539
    %v1673 = vunpack.c.l.b16 %v540
    %v1674 = vunpack.c.h.b16 %v540
    %v1675 = vunpack.c.l.b16 %v541
    %v1676 = vunpack.c.h.b16 %v541
    %v1677 = vunpack.c.l.b16 %v542
    %v1678 = vunpack.c.h.b16 %v542
    %v1679 = vunpack.c.l.b16 %v543
    %v1680 = vunpack.c.h.b16 %v543
    %v1681 = vunpack.c.l.b16 %v544
    %v1682 = vunpack.c.h.b16 %v544
    %v1683 = vunpack.c.l.b16 %v545
    %v1684 = vunpack.c.h.b16 %v545
    %v1685 = vunpack.c.l.b16 %v546
    %v1686 = vunpack.c.h.b16 %v546
    %v1687 = vunpack.c.l.b16 %v547
    %v1688 = vunpack.c.h.b16 %v547
    %v1689 = vunpack.c.l.b16 %v548
    %v1690 = vunpack.c.h.b16 %v548
    %v1691 = vunpack.c.l.b16 %v549
    %v1692 = vunpack.c.h.b16 %v549
    %v1693 = vunpack.c.l.b16 %v550
    %v1694 = vunpack.c.h.b16 %v550
    %v1695 = vunpack.c.l.b16 %v551
    %v1696 = vunpack.c.h.b16 %v551
    %v1697 = vunpack.c.l.b16 %v552
    %v1698 = vunpack.c.h.b16 %v552
    %v1699 = vunpack.c.l.b16 %v553
    %v1700 = vunpack.c.h.b16 %v553
    %v1701 = vunpack.c.l.b16 %v554
    %v1702 = vunpack.c.h.b16 %v554
    %v1703 = vunpack.c.l.b16 %v555
    %v1704 = vunpack.c.h.b16 %v555
    %v1705 = vunpack.c.l.b16 %v556
    %v1706 = vunpack.c.h.b16 %v556
    %v1707 = vunpack.c.l.b16 %v557
    %v1708 = vunpack.c.h.b16 %v557
    %v1709 = vunpack.c.l.b16 %v558
    %v1710 = vunpack.c.h.b16 %v558
    %v1711 = vunpack.c.l.b16 %v559
    %v1712 = vunpack.c.h.b16 %v559
    %v1713 = vunpack.c.l.b16 %v560
    %v1714 = vunpack.c.h.b16 %v560
    %v1715 = vunpack.c.l.b16 %v561
    %v1716 = vunpack.c.h.b16 %v561
    %v1717 = vunpack.c.l.b16 %v562
    %v1718 = vunpack.c.h.b16 %v562
    %v1719 = vunpack.c.l.b16 %v563
    %v1720 = vunpack.c.h.b16 %v563
    %v1721 = vunpack.c.l.b16 %v564
    %v1722 = vunpack.c.h.b16 %v564
    %v1723 = vpack.c.b16 %v957, %v955
    %v1724 = vpack.c.b16 %v958, %v956
    %v1725 = vpack.c.b16 %v961, %v959
    %v1726 = vpack.c.b16 %v962, %v960
    %v1727 = vpack.c.b16 %v965, %v963
    %v1728 = vpack.c.b16 %v966, %v964
    %v1729 = vpack.c.b16 %v969, %v967
    %v1730 = vpack.c.b16 %v970, %v968
    %v1731 = vpack.c.b16 %v973, %v971
    %v1732 = vpack.c.b16 %v974, %v972
    %v1733 = vpack.c.b16 %v977, %v975
    %v1734 = vpack.c.b16 %v978, %v976
    %v1735 = vpack.c.b16 %v981, %v979
    %v1736 = vpack.c.b16 %v982, %v980
    %v1737 = vpack.c.b16 %v985, %v983
    %v1738 = vpack.c.b16 %v986, %v984
    %v1739 = vpack.c.b16 %v989, %v987
    %v1740 = vpack.c.b16 %v990, %v988
    %v1741 = vpack.c.b16 %v993, %v991
    %v1742 = vpack.c.b16 %v994, %v992
    %v1743 = vpack.c.b16 %v997, %v995
    %v1744 = vpack.c.b16 %v998, %v996
    %v1745 = vpack.c.b16 %v1001, %v999
    %v1746 = vpack.c.b16 %v1002, %v1000
    %v1747 = vpack.c.b16 %v1005, %v1003
    %v1748 = vpack.c.b16 %v1006, %v1004
    %v1749 = vpack.c.b16 %v1009, %v1007
    %v1750 = vpack.c.b16 %v1010, %v1008
    %v1751 = vpack.c.b16 %v1013, %v1011
    %v1752 = vpack.c.b16 %v1014, %v1012
    %v1753 = vpack.c.b16 %v1017, %v1015
    %v1754 = vpack.c.b16 %v1018, %v1016
    %v1755 = vpack.c.b16 %v1021, %v1019
    %v1756 = vpack.c.b16 %v1022, %v1020
    %v1757 = vpack.c.b16 %v1025, %v1023
    %v1758 = vpack.c.b16 %v1026, %v1024
    %v1759 = vpack.c.b16 %v1029, %v1027
    %v1760 = vpack.c.b16 %v1030, %v1028
    %v1761 = vpack.c.b16 %v1033, %v1031
    %v1762 = vpack.c.b16 %v1034, %v1032
    %v1763 = vpack.c.b16 %v1037, %v1035
    %v1764 = vpack.c.b16 %v1038, %v1036
    %v1765 = vpack.c.b16 %v1041, %v1039
    %v1766 = vpack.c.b16 %v1042, %v1040
    %v1767 = vpack.c.b16 %v1045, %v1043
    %v1768 = vpack.c.b16 %v1046, %v1044
    %v1769 = vpack.c.b16 %v1049, %v1047
    %v1770 = vpack.c.b16 %v1050, %v1048
    %v1771 = vpack.c.b16 %v1053, %v1051
    %v1772 = vpack.c.b16 %v1054, %v1052
    %v1773 = vpack.c.b16 %v1057, %v1055
    %v1774 = vpack.c.b16 %v1058, %v1056
    %v1775 = vpack.c.b16 %v1061, %v1059
    %v1776 = vpack.c.b16 %v1062, %v1060
    %v1777 = vpack.c.b16 %v1065, %v1063
    %v1778 = vpack.c.b16 %v1066, %v1064
    %v1779 = vpack.c.b16 %v1069, %v1067
    %v1780 = vpack.c.b16 %v1070, %v1068
    %v1781 = vpack.c.b16 %v1073, %v1071
    %v1782 = vpack.c.b16 %v1074, %v1072
    %v1783 = vpack.c.b16 %v1077, %v1075
    %v1784 = vpack.c.b16 %v1078, %v1076
    %v1785 = vpack.c.b16 %v1081, %v1079
    %v1786 = vpack.c.b16 %v1082, %v1080
    %v1787 = vpack.c.b16 %v1085, %v1083
    %v1788 = vpack.c.b16 %v1086, %v1084
    %v1789 = vpack.c.b16 %v1089, %v1087
    %v1790 = vpack.c.b16 %v1090, %v1088
    %v1791 = vpack.c.b16 %v1093, %v1091
    %v1792 = vpack.c.b16 %v1094, %v1092
    %v1793 = vpack.c.b16 %v1097, %v1095
    %v1794 = vpack.c.b16 %v1098, %v1096
    %v1795 = vpack.c.b16 %v1101, %v1099
    %v1796 = vpack.c.b16 %v1102, %v1100
    %v1797 = vpack.c.b16 %v1105, %v1103
    %v1798 = vpack.c.b16 %v1106, %v1104
    %v1799 = vpack.c.b16 %v1109, %v1107
    %v1800 = vpack.c.b16 %v1110, %v1108
    %v1801 = vpack.c.b16 %v1113, %v1111
    %v1802 = vpack.c.b16 %v1114, %v1112
    %v1803 = vpack.c.b16 %v1117, %v1115
    %v1804 = vpack.c.b16 %v1118, %v1116
    %v1805 = vpack.c.b16 %v1121, %v1119
    %v1806 = vpack.c.b16 %v1122, %v1120
    %v1807 = vpack.c.b16 %v1125, %v1123
    %v1808 = vpack.c.b16 %v1126, %v1124
    %v1809 = vpack.c.b16 %v1129, %v1127
    %v1810 = vpack.c.b16 %v1130, %v1128
    %v1811 = vpack.c.b16 %v1133, %v1131
    %v1812 = vpack.c.b16 %v1134, %v1132
    %v1813 = vpack.c.b16 %v1137, %v1135
    %v1814 = vpack.c.b16 %v1138, %v1136
    %v1815 = vpack.c.b16 %v1141, %v1139
    %v1816 = vpack.c.b16 %v1142, %v1140
    %v1817 = vpack.c.b16 %v1145, %v1143
    %v1818 = vpack.c.b16 %v1146, %v1144
    %v1819 = vpack.c.b16 %v1149, %v1147
    %v1820 = vpack.c.b16 %v1150, %v1148
    %v1821 = vpack.c.b16 %v1153, %v1151
    %v1822 = vpack.c.b16 %v1154, %v1152
    %v1823 = vpack.c.b16 %v1157, %v1155
    %v1824 = vpack.c.b16 %v1158, %v1156
    %v1825 = vpack.c.b16 %v1161, %v1159
    %v1826 = vpack.c.b16 %v1162, %v1160
    %v1827 = vpack.c.b16 %v1165, %v1163
    %v1828 = vpack.c.b16 %v1166, %v1164
    %v1829 = vpack.c.b16 %v1169, %v1167
    %v1830 = vpack.c.b16 %v1170, %v1168
    %v1831 = vpack.c.b16 %v1173, %v1171
    %v1832 = vpack.c.b16 %v1174, %v1172
    %v1833 = vpack.c.b16 %v1177, %v1175
    %v1834 = vpack.c.b16 %v1178, %v1176
    %v1835 = vpack.c.b16 %v1181, %v1179
    %v1836 = vpack.c.b16 %v1182, %v1180
    %v1837 = vpack.c.b16 %v1185, %v1183
    %v1838 = vpack.c.b16 %v1186, %v1184
    %v1839 = vpack.c.b16 %v1189, %v1187
    %v1840 = vpack.c.b16 %v1190, %v1188
    %v1841 = vpack.c.b16 %v1193, %v1191
    %v1842 = vpack.c.b16 %v1194, %v1192
    %v1843 = vpack.c.b16 %v1197, %v1195
    %v1844 = vpack.c.b16 %v1198, %v1196
    %v1845 = vpack.c.b16 %v1201, %v1199
    %v1846 = vpack.c.b16 %v1202, %v1200
    %v1847 = vpack.c.b16 %v1205, %v1203
    %v1848 = vpack.c.b16 %v1206, %v1204
    %v1849 = vpack.c.b16 %v1209, %v1207
    %v1850 = vpack.c.b16 %v1210, %v1208
    %v1851 = vpack.c.b16 %v1213, %v1211
    %v1852 = vpack.c.b16 %v1214, %v1212
    %v1853 = vpack.c.b16 %v1217, %v1215
    %v1854 = vpack.c.b16 %v1218, %v1216
    %v1855 = vpack.c.b16 %v1221, %v1219
    %v1856 = vpack.c.b16 %v1222, %v1220
    %v1857 = vpack.c.b16 %v1225, %v1223
    %v1858 = vpack.c.b16 %v1226, %v1224
    %v1859 = vpack.c.b16 %v1229, %v1227
    %v1860 = vpack.c.b16 %v1230, %v1228
    %v1861 = vpack.c.b16 %v1233, %v1231
    %v1862 = vpack.c.b16 %v1234, %v1232
    %v1863 = vpack.c.b16 %v1237, %v1235
    %v1864 = vpack.c.b16 %v1238, %v1236
    %v1865 = vpack.c.b16 %v1241, %v1239
    %v1866 = vpack.c.b16 %v1242, %v1240
    %v1867 = vpack.c.b16 %v1245, %v1243
    %v1868 = vpack.c.b16 %v1246, %v1244
    %v1869 = vpack.c.b16 %v1249, %v1247
    %v1870 = vpack.c.b16 %v1250, %v1248
    %v1871 = vpack.c.b16 %v1253, %v1251
    %v1872 = vpack.c.b16 %v1254, %v1252
    %v1873 = vpack.c.b16 %v1257, %v1255
    %v1874 = vpack.c.b16 %v1258, %v1256
    %v1875 = vpack.c.b16 %v1261, %v1259
    %v1876 = vpack.c.b16 %v1262, %v1260
    %v1877 = vpack.c.b16 %v1265, %v1263
    %v1878 = vpack.c.b16 %v1266, %v1264
    %v1879 = vpack.c.b16 %v1269, %v1267
    %v1880 = vpack.c.b16 %v1270, %v1268
    %v1881 = vpack.c.b16 %v1273, %v1271
    %v1882 = vpack.c.b16 %v1274, %v1272
    %v1883 = vpack.c.b16 %v1277, %v1275
    %v1884 = vpack.c.b16 %v1278, %v1276
    %v1885 = vpack.c.b16 %v1281, %v1279
    %v1886 = vpack.c.b16 %v1282, %v1280
    %v1887 = vpack.c.b16 %v1285, %v1283
    %v1888 = vpack.c.b16 %v1286, %v1284
    %v1889 = vpack.c.b16 %v1289, %v1287
    %v1890 = vpack.c.b16 %v1290, %v1288
    %v1891 = vpack.c.b16 %v1293, %v1291
    %v1892 = vpack.c.b16 %v1294, %v1292
    %v1893 = vpack.c.b16 %v1297, %v1295
    %v1894 = vpack.c.b16 %v1298, %v1296
    %v1895 = vpack.c.b16 %v1301, %v1299
    %v1896 = vpack.c.b16 %v1302, %v1300
    %v1897 = vpack.c.b16 %v1305, %v1303
    %v1898 = vpack.c.b16 %v1306, %v1304
    %v1899 = vpack.c.b16 %v1309, %v1307
    %v1900 = vpack.c.b16 %v1310, %v1308
    %v1901 = vpack.c.b16 %v1313, %v1311
    %v1902 = vpack.c.b16 %v1314, %v1312
    %v1903 = vpack.c.b16 %v1317, %v1315
    %v1904 = vpack.c.b16 %v1318, %v1316
    %v1905 = vpack.c.b16 %v1321, %v1319
    %v1906 = vpack.c.b16 %v1322, %v1320
    %v1907 = vpack.c.b16 %v1325, %v1323
    %v1908 = vpack.c.b16 %v1326, %v1324
    %v1909 = vpack.c.b16 %v1329, %v1327
    %v1910 = vpack.c.b16 %v1330, %v1328
    %v1911 = vpack.c.b16 %v1333, %v1331
    %v1912 = vpack.c.b16 %v1334, %v1332
    %v1913 = vpack.c.b16 %v1337, %v1335
    %v1914 = vpack.c.b16 %v1338, %v1336
    %v1915 = vpack.c.b16 %v1341, %v1339
    %v1916 = vpack.c.b16 %v1342, %v1340
    %v1917 = vpack.c.b16 %v1345, %v1343
    %v1918 = vpack.c.b16 %v1346, %v1344
    %v1919 = vpack.c.b16 %v1349, %v1347
    %v1920 = vpack.c.b16 %v1350, %v1348
    %v1921 = vpack.c.b16 %v1353, %v1351
    %v1922 = vpack.c.b16 %v1354, %v1352
    %v1923 = vpack.c.b16 %v1357, %v1355
    %v1924 = vpack.c.b16 %v1358, %v1356
    %v1925 = vpack.c.b16 %v1361, %v1359
    %v1926 = vpack.c.b16 %v1362, %v1360
    %v1927 = vpack.c.b16 %v1365, %v1363
    %v1928 = vpack.c.b16 %v1366, %v1364
    %v1929 = vpack.c.b16 %v1369, %v1367
    %v1930 = vpack.c.b16 %v1370, %v1368
    %v1931 = vpack.c.b16 %v1373, %v1371
    %v1932 = vpack.c.b16 %v1374, %v1372
    %v1933 = vpack.c.b16 %v1377, %v1375
    %v1934 = vpack.c.b16 %v1378, %v1376
    %v1935 = vpack.c.b16 %v1381, %v1379
    %v1936 = vpack.c.b16 %v1382, %v1380
    %v1937 = vpack.c.b16 %v1385, %v1383
    %v1938 = vpack.c.b16 %v1386, %v1384
    %v1939 = vpack.c.b16 %v1389, %v1387
    %v1940 = vpack.c.b16 %v1390, %v1388
    %v1941 = vpack.c.b16 %v1393, %v1391
    %v1942 = vpack.c.b16 %v1394, %v1392
    %v1943 = vpack.c.b16 %v1397, %v1395
    %v1944 = vpack.c.b16 %v1398, %v1396
    %v1945 = vpack.c.b16 %v1401, %v1399
    %v1946 = vpack.c.b16 %v1402, %v1400
    %v1947 = vpack.c.b16 %v1405, %v1403
    %v1948 = vpack.c.b16 %v1406, %v1404
    %v1949 = vpack.c.b16 %v1409, %v1407
    %v1950 = vpack.c.b16 %v1410, %v1408
    %v1951 = vpack.c.b16 %v1413, %v1411
    %v1952 = vpack.c.b16 %v1414, %v1412
    %v1953 = vpack.c.b16 %v1417, %v1415
    %v1954 = vpack.c.b16 %v1418, %v1416
    %v1955 = vpack.c.b16 %v1421, %v1419
    %v1956 = vpack.c.b16 %v1422, %v1420
    %v1957 = vpack.c.b16 %v1425, %v1423
    %v1958 = vpack.c.b16 %v1426, %v1424
    %v1959 = vpack.c.b16 %v1429, %v1427
    %v1960 = vpack.c.b16 %v1430, %v1428
    %v1961 = vpack.c.b16 %v1433, %v1431
    %v1962 = vpack.c.b16 %v1434, %v1432
    %v1963 = vpack.c.b16 %v1437, %v1435
    %v1964 = vpack.c.b16 %v1438, %v1436
    %v1965 = vpack.c.b16 %v1441, %v1439
    %v1966 = vpack.c.b16 %v1442, %v1440
    %v1967 = vpack.c.b16 %v1445, %v1443
    %v1968 = vpack.c.b16 %v1446, %v1444
    %v1969 = vpack.c.b16 %v1449, %v1447
    %v1970 = vpack.c.b16 %v1450, %v1448
    %v1971 = vpack.c.b16 %v1453, %v1451
    %v1972 = vpack.c.b16 %v1454, %v1452
    %v1973 = vpack.c.b16 %v1457, %v1455
    %v1974 = vpack.c.b16 %v1458, %v1456
    %v1975 = vpack.c.b16 %v1461, %v1459
    %v1976 = vpack.c.b16 %v1462, %v1460
    %v1977 = vpack.c.b16 %v1465, %v1463
    %v1978 = vpack.c.b16 %v1466, %v1464
    %v1979 = vpack.c.b16 %v1469, %v1467
    %v1980 = vpack.c.b16 %v1470, %v1468
    %v1981 = vpack.c.b16 %v1473, %v1471
    %v1982 = vpack.c.b16 %v1474, %v1472
    %v1983 = vpack.c.b16 %v1477, %v1475
    %v1984 = vpack.c.b16 %v1478, %v1476
    %v1985 = vpack.c.b16 %v1481, %v1479
    %v1986 = vpack.c.b16 %v1482, %v1480
    %v1987 = vpack.c.b16 %v1485, %v1483
    %v1988 = vpack.c.b16 %v1486, %v1484
    %v1989 = vpack.c.b16 %v1489, %v1487
    %v1990 = vpack.c.b16 %v1490, %v1488
    %v1991 = vpack.c.b16 %v1493, %v1491
    %v1992 = vpack.c.b16 %v1494, %v1492
    %v1993 = vpack.c.b16 %v1497, %v1495
    %v1994 = vpack.c.b16 %v1498, %v1496
    %v1995 = vpack.c.b16 %v1501, %v1499
    %v1996 = vpack.c.b16 %v1502, %v1500
    %v1997 = vpack.c.b16 %v1505, %v1503
    %v1998 = vpack.c.b16 %v1506, %v1504
    %v1999 = vpack.c.b16 %v1509, %v1507
    %v2000 = vpack.c.b16 %v1510, %v1508
    %v2001 = vpack.c.b16 %v1513, %v1511
    %v2002 = vpack.c.b16 %v1514, %v1512
    %v2003 = vpack.c.b16 %v1517, %v1515
    %v2004 = vpack.c.b16 %v1518, %v1516
    %v2005 = vpack.c.b16 %v1521, %v1519
    %v2006 = vpack.c.b16 %v1522, %v1520
    %v2007 = vpack.c.b16 %v1525, %v1523
    %v2008 = vpack.c.b16 %v1526, %v1524
    %v2009 = vpack.c.b16 %v1529, %v1527
    %v2010 = vpack.c.b16 %v1530, %v1528
    %v2011 = vpack.c.b16 %v1533, %v1531
    %v2012 = vpack.c.b16 %v1534, %v1532
    %v2013 = vpack.c.b16 %v1537, %v1535
    %v2014 = vpack.c.b16 %v1538, %v1536
    %v2015 = vpack.c.b16 %v1541, %v1539
    %v2016 = vpack.c.b16 %v1542, %v1540
    %v2017 = vpack.c.b16 %v1545, %v1543
    %v2018 = vpack.c.b16 %v1546, %v1544
    %v2019 = vpack.c.b16 %v1549, %v1547
    %v2020 = vpack.c.b16 %v1550, %v1548
    %v2021 = vpack.c.b16 %v1553, %v1551
    %v2022 = vpack.c.b16 %v1554, %v1552
    %v2023 = vpack.c.b16 %v1557, %v1555
    %v2024 = vpack.c.b16 %v1558, %v1556
    %v2025 = vpack.c.b16 %v1561, %v1559
    %v2026 = vpack.c.b16 %v1562, %v1560
    %v2027 = vpack.c.b16 %v1565, %v1563
    %v2028 = vpack.c.b16 %v1566, %v1564
    %v2029 = vpack.c.b16 %v1569, %v1567
    %v2030 = vpack.c.b16 %v1570, %v1568
    %v2031 = vpack.c.b16 %v1573, %v1571
    %v2032 = vpack.c.b16 %v1574, %v1572
    %v2033 = vpack.c.b16 %v1577, %v1575
    %v2034 = vpack.c.b16 %v1578, %v1576
    %v2035 = vpack.c.b16 %v1581, %v1579
    %v2036 = vpack.c.b16 %v1582, %v1580
    %v2037 = vpack.c.b16 %v1585, %v1583
    %v2038 = vpack.c.b16 %v1586, %v1584
    %v2039 = vpack.c.b16 %v1589, %v1587
    %v2040 = vpack.c.b16 %v1590, %v1588
    %v2041 = vpack.c.b16 %v1593, %v1591
    %v2042 = vpack.c.b16 %v1594, %v1592
    %v2043 = vpack.c.b16 %v1597, %v1595
    %v2044 = vpack.c.b16 %v1598, %v1596
    %v2045 = vpack.c.b16 %v1601, %v1599
    %v2046 = vpack.c.b16 %v1602, %v1600
    %v2047 = vpack.c.b16 %v1605, %v1603
    %v2048 = vpack.c.b16 %v1606, %v1604
    %v2049 = vpack.c.b16 %v1609, %v1607
    %v2050 = vpack.c.b16 %v1610, %v1608
    %v2051 = vpack.c.b16 %v1613, %v1611
    %v2052 = vpack.c.b16 %v1614, %v1612
    %v2053 = vpack.c.b16 %v1617, %v1615
    %v2054 = vpack.c.b16 %v1618, %v1616
    %v2055 = vpack.c.b16 %v1621, %v1619
    %v2056 = vpack.c.b16 %v1622, %v1620
    %v2057 = vpack.c.b16 %v1625, %v1623
    %v2058 = vpack.c.b16 %v1626, %v1624
    %v2059 = vpack.c.b16 %v1629, %v1627
    %v2060 = vpack.c.b16 %v1630, %v1628
    %v2061 = vpack.c.b16 %v1633, %v1631
    %v2062 = vpack.c.b16 %v1634, %v1632
    %v2063 = vpack.c.b16 %v1637, %v1635
    %v2064 = vpack.c.b16 %v1638, %v1636
    %v2065 = vpack.c.b16 %v1641, %v1639
    %v2066 = vpack.c.b16 %v1642, %v1640
    %v2067 = vpack.c.b16 %v1645, %v1643
    %v2068 = vpack.c.b16 %v1646, %v1644
    %v2069 = vpack.c.b16 %v1649, %v1647
    %v2070 = vpack.c.b16 %v1650, %v1648
    %v2071 = vpack.c.b16 %v1653, %v1651
    %v2072 = vpack.c.b16 %v1654, %v1652
    %v2073 = vpack.c.b16 %v1657, %v1655
    %v2074 = vpack.c.b16 %v1658, %v1656
    %v2075 = vpack.c.b16 %v1661, %v1659
    %v2076 = vpack.c.b16 %v1662, %v1660
    %v2077 = vpack.c.b16 %v1665, %v1663
    %v2078 = vpack.c.b16 %v1666, %v1664
    %v2079 = vpack.c.b16 %v1669, %v1667
    %v2080 = vpack.c.b16 %v1670, %v1668
    %v2081 = vpack.c.b16 %v1673, %v1671
    %v2082 = vpack.c.b16 %v1674, %v1672
    %v2083 = vpack.c.b16 %v1677, %v1675
    %v2084 = vpack.c.b16 %v1678, %v1676
    %v2085 = vpack.c.b16 %v1681, %v1679
    %v2086 = vpack.c.b16 %v1682, %v1680
    %v2087 = vpack.c.b16 %v1685, %v1683
    %v2088 = vpack.c.b16 %v1686, %v1684
    %v2089 = vpack.c.b16 %v1689, %v1687
    %v2090 = vpack.c.b16 %v1690, %v1688
    %v2091 = vpack.c.b16 %v1693, %v1691
    %v2092 = vpack.c.b16 %v1694, %v1692
    %v2093 = vpack.c.b16 %v1697, %v1695
    %v2094 = vpack.c.b16 %v1698, %v1696
    %v2095 = vpack.c.b16 %v1701, %v1699
    %v2096 = vpack.c.b16 %v1702, %v1700
    %v2097 = vpack.c.b16 %v1705, %v1703
    %v2098 = vpack.c.b16 %v1706, %v1704
    %v2099 = vpack.c.b16 %v1709, %v1707
    %v2100 = vpack.c.b16 %v1710, %v1708
    %v2101 = vpack.c.b16 %v1713, %v1711
    %v2102 = vpack.c.b16 %v1714, %v1712
    %v2103 = vpack.c.b16 %v1717, %v1715
    %v2104 = vpack.c.b16 %v1718, %v1716
    %v2105 = vpack.c.b16 %v1721, %v1719
    %v2106 = vpack.c.b16 %v1722, %v1720
    %2491 = vmatpush.bf16.msra.mxu0 %v1737
    %2492 = vmatpush.bf16.msra.mxu0 %v1735
    %2493 = vmatpush.bf16.msra.mxu0 %v1733
    %2494 = vmatpush.bf16.msra.mxu0 %v1731
    %2495 = vmatpush.bf16.msra.mxu0 %v1729
    %2496 = vmatpush.bf16.msra.mxu0 %v1727
    %2497 = vmatpush.bf16.msra.mxu0 %v1725
    %2498 = vmatpush.bf16.msra.mxu0 %v1723
    %2499 = vmatmul.bf16.gmra.mxu0 %v157
    %v2500 = vpop.f32.mrf.mxu0
    %v2501 = vadd.f32 %v567, %v2500
    %v2502 = vpop.f32.mrf.mxu0
    %2503 = vdwg.mxu0
    %2504 = vmatpush.bf16.msra.mxu0 %v1753
    %2505 = vmatpush.bf16.msra.mxu0 %v1751
    %2506 = vmatpush.bf16.msra.mxu0 %v1749
    %2507 = vmatpush.bf16.msra.mxu0 %v1747
    %2508 = vmatpush.bf16.msra.mxu0 %v1745
    %2509 = vmatpush.bf16.msra.mxu0 %v1743
    %2510 = vmatpush.bf16.msra.mxu0 %v1741
    %2511 = vmatpush.bf16.msra.mxu0 %v1739
    %2512 = vmatmul.bf16.gmra.mxu0 %v158
    %v2513 = vpop.f32.mrf.mxu0
    %v2514 = vadd.f32 %v2501, %v2513
    %v2515 = vpop.f32.mrf.mxu0
    %2516 = vdwg.mxu0
    %2517 = vmatpush.bf16.msra.mxu0 %v1769
    %2518 = vmatpush.bf16.msra.mxu0 %v1767
    %2519 = vmatpush.bf16.msra.mxu0 %v1765
    %2520 = vmatpush.bf16.msra.mxu0 %v1763
    %2521 = vmatpush.bf16.msra.mxu0 %v1761
    %2522 = vmatpush.bf16.msra.mxu0 %v1759
    %2523 = vmatpush.bf16.msra.mxu0 %v1757
    %2524 = vmatpush.bf16.msra.mxu0 %v1755
    %2525 = vmatmul.bf16.gmra.mxu0 %v159
    %v2526 = vpop.f32.mrf.mxu0
    %v2527 = vadd.f32 %v2514, %v2526
    %v2528 = vpop.f32.mrf.mxu0
    %2529 = vdwg.mxu0
    %2530 = vmatpush.bf16.msra.mxu0 %v1785
    %2531 = vmatpush.bf16.msra.mxu0 %v1783
    %2532 = vmatpush.bf16.msra.mxu0 %v1781
    %2533 = vmatpush.bf16.msra.mxu0 %v1779
    %2534 = vmatpush.bf16.msra.mxu0 %v1777
    %2535 = vmatpush.bf16.msra.mxu0 %v1775
    %2536 = vmatpush.bf16.msra.mxu0 %v1773
    %2537 = vmatpush.bf16.msra.mxu0 %v1771
    %2538 = vmatmul.bf16.gmra.mxu0 %v160
    %v2539 = vpop.f32.mrf.mxu0
    %v2540 = vadd.f32 %v2527, %v2539
    %v2541 = vpop.f32.mrf.mxu0
    %2542 = vdwg.mxu0
    %2543 = vmatpush.bf16.msra.mxu0 %v1801
    %2544 = vmatpush.bf16.msra.mxu0 %v1799
    %2545 = vmatpush.bf16.msra.mxu0 %v1797
    %2546 = vmatpush.bf16.msra.mxu0 %v1795
    %2547 = vmatpush.bf16.msra.mxu0 %v1793
    %2548 = vmatpush.bf16.msra.mxu0 %v1791
    %2549 = vmatpush.bf16.msra.mxu0 %v1789
    %2550 = vmatpush.bf16.msra.mxu0 %v1787
    %2551 = vmatmul.bf16.gmra.mxu0 %v161
    %v2552 = vpop.f32.mrf.mxu0
    %v2553 = vadd.f32 %v2540, %v2552
    %v2554 = vpop.f32.mrf.mxu0
    %2555 = vdwg.mxu0
    %2556 = vmatpush.bf16.msra.mxu0 %v1817
    %2557 = vmatpush.bf16.msra.mxu0 %v1815
    %2558 = vmatpush.bf16.msra.mxu0 %v1813
    %2559 = vmatpush.bf16.msra.mxu0 %v1811
    %2560 = vmatpush.bf16.msra.mxu0 %v1809
    %2561 = vmatpush.bf16.msra.mxu0 %v1807
    %2562 = vmatpush.bf16.msra.mxu0 %v1805
    %2563 = vmatpush.bf16.msra.mxu0 %v1803
    %2564 = vmatmul.bf16.gmra.mxu0 %v162
    %v2565 = vpop.f32.mrf.mxu0
    %v2566 = vadd.f32 %v2553, %v2565
    %v2567 = vpop.f32.mrf.mxu0
    %2568 = vdwg.mxu0
    %2569 = vmatpush.bf16.msra.mxu0 %v1833
    %2570 = vmatpush.bf16.msra.mxu0 %v1831
    %2571 = vmatpush.bf16.msra.mxu0 %v1829
    %2572 = vmatpush.bf16.msra.mxu0 %v1827
    %2573 = vmatpush.bf16.msra.mxu0 %v1825
    %2574 = vmatpush.bf16.msra.mxu0 %v1823
    %2575 = vmatpush.bf16.msra.mxu0 %v1821
    %2576 = vmatpush.bf16.msra.mxu0 %v1819
    %2577 = vmatmul.bf16.gmra.mxu0 %v163
    %v2578 = vpop.f32.mrf.mxu0
    %v2579 = vadd.f32 %v2566, %v2578
    %v2580 = vpop.f32.mrf.mxu0
    %2581 = vdwg.mxu0
    %2582 = vmatpush.bf16.msra.mxu0 %v1849
    %2583 = vmatpush.bf16.msra.mxu0 %v1847
    %2584 = vmatpush.bf16.msra.mxu0 %v1845
    %2585 = vmatpush.bf16.msra.mxu0 %v1843
    %2586 = vmatpush.bf16.msra.mxu0 %v1841
    %2587 = vmatpush.bf16.msra.mxu0 %v1839
    %2588 = vmatpush.bf16.msra.mxu0 %v1837
    %2589 = vmatpush.bf16.msra.mxu0 %v1835
    %2590 = vmatmul.bf16.gmra.mxu0 %v164
    %v2591 = vpop.f32.mrf.mxu0
    %v2592 = vadd.f32 %v2579, %v2591
    %v2593 = vpop.f32.mrf.mxu0
    %2594 = vdwg.mxu0
    %2595 = vmatpush.bf16.msra.mxu0 %v1865
    %2596 = vmatpush.bf16.msra.mxu0 %v1863
    %2597 = vmatpush.bf16.msra.mxu0 %v1861
    %2598 = vmatpush.bf16.msra.mxu0 %v1859
    %2599 = vmatpush.bf16.msra.mxu0 %v1857
    %2600 = vmatpush.bf16.msra.mxu0 %v1855
    %2601 = vmatpush.bf16.msra.mxu0 %v1853
    %2602 = vmatpush.bf16.msra.mxu0 %v1851
    %2603 = vmatmul.bf16.gmra.mxu0 %v165
    %v2604 = vpop.f32.mrf.mxu0
    %v2605 = vadd.f32 %v2592, %v2604
    %v2606 = vpop.f32.mrf.mxu0
    %2607 = vdwg.mxu0
    %2608 = vmatpush.bf16.msra.mxu0 %v1881
    %2609 = vmatpush.bf16.msra.mxu0 %v1879
    %2610 = vmatpush.bf16.msra.mxu0 %v1877
    %2611 = vmatpush.bf16.msra.mxu0 %v1875
    %2612 = vmatpush.bf16.msra.mxu0 %v1873
    %2613 = vmatpush.bf16.msra.mxu0 %v1871
    %2614 = vmatpush.bf16.msra.mxu0 %v1869
    %2615 = vmatpush.bf16.msra.mxu0 %v1867
    %2616 = vmatmul.bf16.gmra.mxu0 %v166
    %v2617 = vpop.f32.mrf.mxu0
    %v2618 = vadd.f32 %v2605, %v2617
    %v2619 = vpop.f32.mrf.mxu0
    %2620 = vdwg.mxu0
    %2621 = vmatpush.bf16.msra.mxu0 %v1897
    %2622 = vmatpush.bf16.msra.mxu0 %v1895
    %2623 = vmatpush.bf16.msra.mxu0 %v1893
    %2624 = vmatpush.bf16.msra.mxu0 %v1891
    %2625 = vmatpush.bf16.msra.mxu0 %v1889
    %2626 = vmatpush.bf16.msra.mxu0 %v1887
    %2627 = vmatpush.bf16.msra.mxu0 %v1885
    %2628 = vmatpush.bf16.msra.mxu0 %v1883
    %2629 = vmatmul.bf16.gmra.mxu0 %v167
    %v2630 = vpop.f32.mrf.mxu0
    %v2631 = vadd.f32 %v2618, %v2630
    %v2632 = vpop.f32.mrf.mxu0
    %2633 = vdwg.mxu0
    %2634 = vmatpush.bf16.msra.mxu0 %v1913
    %2635 = vmatpush.bf16.msra.mxu0 %v1911
    %2636 = vmatpush.bf16.msra.mxu0 %v1909
    %2637 = vmatpush.bf16.msra.mxu0 %v1907
    %2638 = vmatpush.bf16.msra.mxu0 %v1905
    %2639 = vmatpush.bf16.msra.mxu0 %v1903
    %2640 = vmatpush.bf16.msra.mxu0 %v1901
    %2641 = vmatpush.bf16.msra.mxu0 %v1899
    %2642 = vmatmul.bf16.gmra.mxu0 %v168
    %v2643 = vpop.f32.mrf.mxu0
    %v2644 = vadd.f32 %v2631, %v2643
    %v2645 = vpop.f32.mrf.mxu0
    %2646 = vdwg.mxu0
    %2647 = vmatpush.bf16.msra.mxu0 %v1929
    %2648 = vmatpush.bf16.msra.mxu0 %v1927
    %2649 = vmatpush.bf16.msra.mxu0 %v1925
    %2650 = vmatpush.bf16.msra.mxu0 %v1923
    %2651 = vmatpush.bf16.msra.mxu0 %v1921
    %2652 = vmatpush.bf16.msra.mxu0 %v1919
    %2653 = vmatpush.bf16.msra.mxu0 %v1917
    %2654 = vmatpush.bf16.msra.mxu0 %v1915
    %2655 = vmatmul.bf16.gmra.mxu0 %v169
    %v2656 = vpop.f32.mrf.mxu0
    %v2657 = vadd.f32 %v2644, %v2656
    %v2658 = vpop.f32.mrf.mxu0
    %2659 = vdwg.mxu0
    %2660 = vmatpush.bf16.msra.mxu0 %v1945
    %2661 = vmatpush.bf16.msra.mxu0 %v1943
    %2662 = vmatpush.bf16.msra.mxu0 %v1941
    %2663 = vmatpush.bf16.msra.mxu0 %v1939
    %2664 = vmatpush.bf16.msra.mxu0 %v1937
    %2665 = vmatpush.bf16.msra.mxu0 %v1935
    %2666 = vmatpush.bf16.msra.mxu0 %v1933
    %2667 = vmatpush.bf16.msra.mxu0 %v1931
    %2668 = vmatmul.bf16.gmra.mxu0 %v170
    %v2669 = vpop.f32.mrf.mxu0
    %v2670 = vadd.f32 %v2657, %v2669
    %v2671 = vpop.f32.mrf.mxu0
    %2672 = vdwg.mxu0
    %2673 = vmatpush.bf16.msra.mxu0 %v1961
    %2674 = vmatpush.bf16.msra.mxu0 %v1959
    %2675 = vmatpush.bf16.msra.mxu0 %v1957
    %2676 = vmatpush.bf16.msra.mxu0 %v1955
    %2677 = vmatpush.bf16.msra.mxu0 %v1953
    %2678 = vmatpush.bf16.msra.mxu0 %v1951
    %2679 = vmatpush.bf16.msra.mxu0 %v1949
    %2680 = vmatpush.bf16.msra.mxu0 %v1947
    %2681 = vmatmul.bf16.gmra.mxu0 %v171
    %v2682 = vpop.f32.mrf.mxu0
    %v2683 = vadd.f32 %v2670, %v2682
    %v2684 = vpop.f32.mrf.mxu0
    %2685 = vdwg.mxu0
    %2686 = vmatpush.bf16.msra.mxu0 %v1977
    %2687 = vmatpush.bf16.msra.mxu0 %v1975
    %2688 = vmatpush.bf16.msra.mxu0 %v1973
    %2689 = vmatpush.bf16.msra.mxu0 %v1971
    %2690 = vmatpush.bf16.msra.mxu0 %v1969
    %2691 = vmatpush.bf16.msra.mxu0 %v1967
    %2692 = vmatpush.bf16.msra.mxu0 %v1965
    %2693 = vmatpush.bf16.msra.mxu0 %v1963
    %2694 = vmatmul.bf16.gmra.mxu0 %v172
    %v2695 = vpop.f32.mrf.mxu0
    %v2696 = vadd.f32 %v2683, %v2695
    %v2697 = vpop.f32.mrf.mxu0
    %2698 = vdwg.mxu0
    %2699 = vmatpush.bf16.msra.mxu0 %v1993
    %2700 = vmatpush.bf16.msra.mxu0 %v1991
    %2701 = vmatpush.bf16.msra.mxu0 %v1989
    %2702 = vmatpush.bf16.msra.mxu0 %v1987
    %2703 = vmatpush.bf16.msra.mxu0 %v1985
    %2704 = vmatpush.bf16.msra.mxu0 %v1983
    %2705 = vmatpush.bf16.msra.mxu0 %v1981
    %2706 = vmatpush.bf16.msra.mxu0 %v1979
    %2707 = vmatmul.bf16.gmra.mxu0 %v173
    %v2708 = vpop.f32.mrf.mxu0
    %v2709 = vadd.f32 %v2696, %v2708
    %v2710 = vpop.f32.mrf.mxu0
    %2711 = vdwg.mxu0
    %2712 = vmatpush.bf16.msra.mxu0 %v2009
    %2713 = vmatpush.bf16.msra.mxu0 %v2007
    %2714 = vmatpush.bf16.msra.mxu0 %v2005
    %2715 = vmatpush.bf16.msra.mxu0 %v2003
    %2716 = vmatpush.bf16.msra.mxu0 %v2001
    %2717 = vmatpush.bf16.msra.mxu0 %v1999
    %2718 = vmatpush.bf16.msra.mxu0 %v1997
    %2719 = vmatpush.bf16.msra.mxu0 %v1995
    %2720 = vmatmul.bf16.gmra.mxu0 %v174
    %v2721 = vpop.f32.mrf.mxu0
    %v2722 = vadd.f32 %v2709, %v2721
    %v2723 = vpop.f32.mrf.mxu0
    %2724 = vdwg.mxu0
    %2725 = vmatpush.bf16.msra.mxu0 %v2025
    %2726 = vmatpush.bf16.msra.mxu0 %v2023
    %2727 = vmatpush.bf16.msra.mxu0 %v2021
    %2728 = vmatpush.bf16.msra.mxu0 %v2019
    %2729 = vmatpush.bf16.msra.mxu0 %v2017
    %2730 = vmatpush.bf16.msra.mxu0 %v2015
    %2731 = vmatpush.bf16.msra.mxu0 %v2013
    %2732 = vmatpush.bf16.msra.mxu0 %v2011
    %2733 = vmatmul.bf16.gmra.mxu0 %v175
    %v2734 = vpop.f32.mrf.mxu0
    %v2735 = vadd.f32 %v2722, %v2734
    %v2736 = vpop.f32.mrf.mxu0
    %2737 = vdwg.mxu0
    %2738 = vmatpush.bf16.msra.mxu0 %v2041
    %2739 = vmatpush.bf16.msra.mxu0 %v2039
    %2740 = vmatpush.bf16.msra.mxu0 %v2037
    %2741 = vmatpush.bf16.msra.mxu0 %v2035
    %2742 = vmatpush.bf16.msra.mxu0 %v2033
    %2743 = vmatpush.bf16.msra.mxu0 %v2031
    %2744 = vmatpush.bf16.msra.mxu0 %v2029
    %2745 = vmatpush.bf16.msra.mxu0 %v2027
    %2746 = vmatmul.bf16.gmra.mxu0 %v176
    %v2747 = vpop.f32.mrf.mxu0
    %v2748 = vadd.f32 %v2735, %v2747
    %v2749 = vpop.f32.mrf.mxu0
    %2750 = vdwg.mxu0
    %2751 = vmatpush.bf16.msra.mxu0 %v2057
    %2752 = vmatpush.bf16.msra.mxu0 %v2055
    %2753 = vmatpush.bf16.msra.mxu0 %v2053
    %2754 = vmatpush.bf16.msra.mxu0 %v2051
    %2755 = vmatpush.bf16.msra.mxu0 %v2049
    %2756 = vmatpush.bf16.msra.mxu0 %v2047
    %2757 = vmatpush.bf16.msra.mxu0 %v2045
    %2758 = vmatpush.bf16.msra.mxu0 %v2043
    %2759 = vmatmul.bf16.gmra.mxu0 %v177
    %v2760 = vpop.f32.mrf.mxu0
    %v2761 = vadd.f32 %v2748, %v2760
    %v2762 = vpop.f32.mrf.mxu0
    %2763 = vdwg.mxu0
    %2764 = vmatpush.bf16.msra.mxu0 %v2073
    %2765 = vmatpush.bf16.msra.mxu0 %v2071
    %2766 = vmatpush.bf16.msra.mxu0 %v2069
    %2767 = vmatpush.bf16.msra.mxu0 %v2067
    %2768 = vmatpush.bf16.msra.mxu0 %v2065
    %2769 = vmatpush.bf16.msra.mxu0 %v2063
    %2770 = vmatpush.bf16.msra.mxu0 %v2061
    %2771 = vmatpush.bf16.msra.mxu0 %v2059
    %2772 = vmatmul.bf16.gmra.mxu0 %v178
    %v2773 = vpop.f32.mrf.mxu0
    %v2774 = vadd.f32 %v2761, %v2773
    %v2775 = vpop.f32.mrf.mxu0
    %2776 = vdwg.mxu0
    %2777 = vmatpush.bf16.msra.mxu0 %v2089
    %2778 = vmatpush.bf16.msra.mxu0 %v2087
    %2779 = vmatpush.bf16.msra.mxu0 %v2085
    %2780 = vmatpush.bf16.msra.mxu0 %v2083
    %2781 = vmatpush.bf16.msra.mxu0 %v2081
    %2782 = vmatpush.bf16.msra.mxu0 %v2079
    %2783 = vmatpush.bf16.msra.mxu0 %v2077
    %2784 = vmatpush.bf16.msra.mxu0 %v2075
    %2785 = vmatmul.bf16.gmra.mxu0 %v179
    %v2786 = vpop.f32.mrf.mxu0
    %v2787 = vadd.f32 %v2774, %v2786
    %v2788 = vpop.f32.mrf.mxu0
    %2789 = vdwg.mxu0
    %2790 = vmatpush.bf16.msra.mxu0 %v2105
    %2791 = vmatpush.bf16.msra.mxu0 %v2103
    %2792 = vmatpush.bf16.msra.mxu0 %v2101
    %2793 = vmatpush.bf16.msra.mxu0 %v2099
    %2794 = vmatpush.bf16.msra.mxu0 %v2097
    %2795 = vmatpush.bf16.msra.mxu0 %v2095
    %2796 = vmatpush.bf16.msra.mxu0 %v2093
    %2797 = vmatpush.bf16.msra.mxu0 %v2091
    %2798 = vmatmul.bf16.gmra.mxu0 %v180
    %v2799 = vpop.f32.mrf.mxu0
    %v2800 = vadd.f32 %v2787, %v2799
    %v2801 = vpop.f32.mrf.mxu0
    %2802 = vdwg.mxu0
    %2803 = vmatpush.bf16.msra.mxu0 %v1738
    %2804 = vmatpush.bf16.msra.mxu0 %v1736
    %2805 = vmatpush.bf16.msra.mxu0 %v1734
    %2806 = vmatpush.bf16.msra.mxu0 %v1732
    %2807 = vmatpush.bf16.msra.mxu0 %v1730
    %2808 = vmatpush.bf16.msra.mxu0 %v1728
    %2809 = vmatpush.bf16.msra.mxu0 %v1726
    %2810 = vmatpush.bf16.msra.mxu0 %v1724
    %2811 = vmatmul.bf16.gmra.mxu0 %v157
    %v2812 = vpop.f32.mrf.mxu0
    %v2813 = vadd.f32 %v568, %v2812
    %v2814 = vpop.f32.mrf.mxu0
    %2815 = vdwg.mxu0
    %2816 = vmatpush.bf16.msra.mxu0 %v1754
    %2817 = vmatpush.bf16.msra.mxu0 %v1752
    %2818 = vmatpush.bf16.msra.mxu0 %v1750
    %2819 = vmatpush.bf16.msra.mxu0 %v1748
    %2820 = vmatpush.bf16.msra.mxu0 %v1746
    %2821 = vmatpush.bf16.msra.mxu0 %v1744
    %2822 = vmatpush.bf16.msra.mxu0 %v1742
    %2823 = vmatpush.bf16.msra.mxu0 %v1740
    %2824 = vmatmul.bf16.gmra.mxu0 %v158
    %v2825 = vpop.f32.mrf.mxu0
    %v2826 = vadd.f32 %v2813, %v2825
    %v2827 = vpop.f32.mrf.mxu0
    %2828 = vdwg.mxu0
    %2829 = vmatpush.bf16.msra.mxu0 %v1770
    %2830 = vmatpush.bf16.msra.mxu0 %v1768
    %2831 = vmatpush.bf16.msra.mxu0 %v1766
    %2832 = vmatpush.bf16.msra.mxu0 %v1764
    %2833 = vmatpush.bf16.msra.mxu0 %v1762
    %2834 = vmatpush.bf16.msra.mxu0 %v1760
    %2835 = vmatpush.bf16.msra.mxu0 %v1758
    %2836 = vmatpush.bf16.msra.mxu0 %v1756
    %2837 = vmatmul.bf16.gmra.mxu0 %v159
    %v2838 = vpop.f32.mrf.mxu0
    %v2839 = vadd.f32 %v2826, %v2838
    %v2840 = vpop.f32.mrf.mxu0
    %2841 = vdwg.mxu0
    %2842 = vmatpush.bf16.msra.mxu0 %v1786
    %2843 = vmatpush.bf16.msra.mxu0 %v1784
    %2844 = vmatpush.bf16.msra.mxu0 %v1782
    %2845 = vmatpush.bf16.msra.mxu0 %v1780
    %2846 = vmatpush.bf16.msra.mxu0 %v1778
    %2847 = vmatpush.bf16.msra.mxu0 %v1776
    %2848 = vmatpush.bf16.msra.mxu0 %v1774
    %2849 = vmatpush.bf16.msra.mxu0 %v1772
    %2850 = vmatmul.bf16.gmra.mxu0 %v160
    %v2851 = vpop.f32.mrf.mxu0
    %v2852 = vadd.f32 %v2839, %v2851
    %v2853 = vpop.f32.mrf.mxu0
    %2854 = vdwg.mxu0
    %2855 = vmatpush.bf16.msra.mxu0 %v1802
    %2856 = vmatpush.bf16.msra.mxu0 %v1800
    %2857 = vmatpush.bf16.msra.mxu0 %v1798
    %2858 = vmatpush.bf16.msra.mxu0 %v1796
    %2859 = vmatpush.bf16.msra.mxu0 %v1794
    %2860 = vmatpush.bf16.msra.mxu0 %v1792
    %2861 = vmatpush.bf16.msra.mxu0 %v1790
    %2862 = vmatpush.bf16.msra.mxu0 %v1788
    %2863 = vmatmul.bf16.gmra.mxu0 %v161
    %v2864 = vpop.f32.mrf.mxu0
    %v2865 = vadd.f32 %v2852, %v2864
    %v2866 = vpop.f32.mrf.mxu0
    %2867 = vdwg.mxu0
    %2868 = vmatpush.bf16.msra.mxu0 %v1818
    %2869 = vmatpush.bf16.msra.mxu0 %v1816
    %2870 = vmatpush.bf16.msra.mxu0 %v1814
    %2871 = vmatpush.bf16.msra.mxu0 %v1812
    %2872 = vmatpush.bf16.msra.mxu0 %v1810
    %2873 = vmatpush.bf16.msra.mxu0 %v1808
    %2874 = vmatpush.bf16.msra.mxu0 %v1806
    %2875 = vmatpush.bf16.msra.mxu0 %v1804
    %2876 = vmatmul.bf16.gmra.mxu0 %v162
    %v2877 = vpop.f32.mrf.mxu0
    %v2878 = vadd.f32 %v2865, %v2877
    %v2879 = vpop.f32.mrf.mxu0
    %2880 = vdwg.mxu0
    %2881 = vmatpush.bf16.msra.mxu0 %v1834
    %2882 = vmatpush.bf16.msra.mxu0 %v1832
    %2883 = vmatpush.bf16.msra.mxu0 %v1830
    %2884 = vmatpush.bf16.msra.mxu0 %v1828
    %2885 = vmatpush.bf16.msra.mxu0 %v1826
    %2886 = vmatpush.bf16.msra.mxu0 %v1824
    %2887 = vmatpush.bf16.msra.mxu0 %v1822
    %2888 = vmatpush.bf16.msra.mxu0 %v1820
    %2889 = vmatmul.bf16.gmra.mxu0 %v163
    %v2890 = vpop.f32.mrf.mxu0
    %v2891 = vadd.f32 %v2878, %v2890
    %v2892 = vpop.f32.mrf.mxu0
    %2893 = vdwg.mxu0
    %2894 = vmatpush.bf16.msra.mxu0 %v1850
    %2895 = vmatpush.bf16.msra.mxu0 %v1848
    %2896 = vmatpush.bf16.msra.mxu0 %v1846
    %2897 = vmatpush.bf16.msra.mxu0 %v1844
    %2898 = vmatpush.bf16.msra.mxu0 %v1842
    %2899 = vmatpush.bf16.msra.mxu0 %v1840
    %2900 = vmatpush.bf16.msra.mxu0 %v1838
    %2901 = vmatpush.bf16.msra.mxu0 %v1836
    %2902 = vmatmul.bf16.gmra.mxu0 %v164
    %v2903 = vpop.f32.mrf.mxu0
    %v2904 = vadd.f32 %v2891, %v2903
    %v2905 = vpop.f32.mrf.mxu0
    %2906 = vdwg.mxu0
    %2907 = vmatpush.bf16.msra.mxu0 %v1866
    %2908 = vmatpush.bf16.msra.mxu0 %v1864
    %2909 = vmatpush.bf16.msra.mxu0 %v1862
    %2910 = vmatpush.bf16.msra.mxu0 %v1860
    %2911 = vmatpush.bf16.msra.mxu0 %v1858
    %2912 = vmatpush.bf16.msra.mxu0 %v1856
    %2913 = vmatpush.bf16.msra.mxu0 %v1854
    %2914 = vmatpush.bf16.msra.mxu0 %v1852
    %2915 = vmatmul.bf16.gmra.mxu0 %v165
    %v2916 = vpop.f32.mrf.mxu0
    %v2917 = vadd.f32 %v2904, %v2916
    %v2918 = vpop.f32.mrf.mxu0
    %2919 = vdwg.mxu0
    %2920 = vmatpush.bf16.msra.mxu0 %v1882
    %2921 = vmatpush.bf16.msra.mxu0 %v1880
    %2922 = vmatpush.bf16.msra.mxu0 %v1878
    %2923 = vmatpush.bf16.msra.mxu0 %v1876
    %2924 = vmatpush.bf16.msra.mxu0 %v1874
    %2925 = vmatpush.bf16.msra.mxu0 %v1872
    %2926 = vmatpush.bf16.msra.mxu0 %v1870
    %2927 = vmatpush.bf16.msra.mxu0 %v1868
    %2928 = vmatmul.bf16.gmra.mxu0 %v166
    %v2929 = vpop.f32.mrf.mxu0
    %v2930 = vadd.f32 %v2917, %v2929
    %v2931 = vpop.f32.mrf.mxu0
    %2932 = vdwg.mxu0
    %2933 = vmatpush.bf16.msra.mxu0 %v1898
    %2934 = vmatpush.bf16.msra.mxu0 %v1896
    %2935 = vmatpush.bf16.msra.mxu0 %v1894
    %2936 = vmatpush.bf16.msra.mxu0 %v1892
    %2937 = vmatpush.bf16.msra.mxu0 %v1890
    %2938 = vmatpush.bf16.msra.mxu0 %v1888
    %2939 = vmatpush.bf16.msra.mxu0 %v1886
    %2940 = vmatpush.bf16.msra.mxu0 %v1884
    %2941 = vmatmul.bf16.gmra.mxu0 %v167
    %v2942 = vpop.f32.mrf.mxu0
    %v2943 = vadd.f32 %v2930, %v2942
    %v2944 = vpop.f32.mrf.mxu0
    %2945 = vdwg.mxu0
    %2946 = vmatpush.bf16.msra.mxu0 %v1914
    %2947 = vmatpush.bf16.msra.mxu0 %v1912
    %2948 = vmatpush.bf16.msra.mxu0 %v1910
    %2949 = vmatpush.bf16.msra.mxu0 %v1908
    %2950 = vmatpush.bf16.msra.mxu0 %v1906
    %2951 = vmatpush.bf16.msra.mxu0 %v1904
    %2952 = vmatpush.bf16.msra.mxu0 %v1902
    %2953 = vmatpush.bf16.msra.mxu0 %v1900
    %2954 = vmatmul.bf16.gmra.mxu0 %v168
    %v2955 = vpop.f32.mrf.mxu0
    %v2956 = vadd.f32 %v2943, %v2955
    %v2957 = vpop.f32.mrf.mxu0
    %2958 = vdwg.mxu0
    %2959 = vmatpush.bf16.msra.mxu0 %v1930
    %2960 = vmatpush.bf16.msra.mxu0 %v1928
    %2961 = vmatpush.bf16.msra.mxu0 %v1926
    %2962 = vmatpush.bf16.msra.mxu0 %v1924
    %2963 = vmatpush.bf16.msra.mxu0 %v1922
    %2964 = vmatpush.bf16.msra.mxu0 %v1920
    %2965 = vmatpush.bf16.msra.mxu0 %v1918
    %2966 = vmatpush.bf16.msra.mxu0 %v1916
    %2967 = vmatmul.bf16.gmra.mxu0 %v169
    %v2968 = vpop.f32.mrf.mxu0
    %v2969 = vadd.f32 %v2956, %v2968
    %v2970 = vpop.f32.mrf.mxu0
    %2971 = vdwg.mxu0
    %2972 = vmatpush.bf16.msra.mxu0 %v1946
    %2973 = vmatpush.bf16.msra.mxu0 %v1944
    %2974 = vmatpush.bf16.msra.mxu0 %v1942
    %2975 = vmatpush.bf16.msra.mxu0 %v1940
    %2976 = vmatpush.bf16.msra.mxu0 %v1938
    %2977 = vmatpush.bf16.msra.mxu0 %v1936
    %2978 = vmatpush.bf16.msra.mxu0 %v1934
    %2979 = vmatpush.bf16.msra.mxu0 %v1932
    %2980 = vmatmul.bf16.gmra.mxu0 %v170
    %v2981 = vpop.f32.mrf.mxu0
    %v2982 = vadd.f32 %v2969, %v2981
    %v2983 = vpop.f32.mrf.mxu0
    %2984 = vdwg.mxu0
    %2985 = vmatpush.bf16.msra.mxu0 %v1962
    %2986 = vmatpush.bf16.msra.mxu0 %v1960
    %2987 = vmatpush.bf16.msra.mxu0 %v1958
    %2988 = vmatpush.bf16.msra.mxu0 %v1956
    %2989 = vmatpush.bf16.msra.mxu0 %v1954
    %2990 = vmatpush.bf16.msra.mxu0 %v1952
    %2991 = vmatpush.bf16.msra.mxu0 %v1950
    %2992 = vmatpush.bf16.msra.mxu0 %v1948
    %2993 = vmatmul.bf16.gmra.mxu0 %v171
    %v2994 = vpop.f32.mrf.mxu0
    %v2995 = vadd.f32 %v2982, %v2994
    %v2996 = vpop.f32.mrf.mxu0
    %2997 = vdwg.mxu0
    %2998 = vmatpush.bf16.msra.mxu0 %v1978
    %2999 = vmatpush.bf16.msra.mxu0 %v1976
    %3000 = vmatpush.bf16.msra.mxu0 %v1974
    %3001 = vmatpush.bf16.msra.mxu0 %v1972
    %3002 = vmatpush.bf16.msra.mxu0 %v1970
    %3003 = vmatpush.bf16.msra.mxu0 %v1968
    %3004 = vmatpush.bf16.msra.mxu0 %v1966
    %3005 = vmatpush.bf16.msra.mxu0 %v1964
    %3006 = vmatmul.bf16.gmra.mxu0 %v172
    %v3007 = vpop.f32.mrf.mxu0
    %v3008 = vadd.f32 %v2995, %v3007
    %v3009 = vpop.f32.mrf.mxu0
    %3010 = vdwg.mxu0
    %3011 = vmatpush.bf16.msra.mxu0 %v1994
    %3012 = vmatpush.bf16.msra.mxu0 %v1992
    %3013 = vmatpush.bf16.msra.mxu0 %v1990
    %3014 = vmatpush.bf16.msra.mxu0 %v1988
    %3015 = vmatpush.bf16.msra.mxu0 %v1986
    %3016 = vmatpush.bf16.msra.mxu0 %v1984
    %3017 = vmatpush.bf16.msra.mxu0 %v1982
    %3018 = vmatpush.bf16.msra.mxu0 %v1980
    %3019 = vmatmul.bf16.gmra.mxu0 %v173
    %v3020 = vpop.f32.mrf.mxu0
    %v3021 = vadd.f32 %v3008, %v3020
    %v3022 = vpop.f32.mrf.mxu0
    %3023 = vdwg.mxu0
    %3024 = vmatpush.bf16.msra.mxu0 %v2010
    %3025 = vmatpush.bf16.msra.mxu0 %v2008
    %3026 = vmatpush.bf16.msra.mxu0 %v2006
    %3027 = vmatpush.bf16.msra.mxu0 %v2004
    %3028 = vmatpush.bf16.msra.mxu0 %v2002
    %3029 = vmatpush.bf16.msra.mxu0 %v2000
    %3030 = vmatpush.bf16.msra.mxu0 %v1998
    %3031 = vmatpush.bf16.msra.mxu0 %v1996
    %3032 = vmatmul.bf16.gmra.mxu0 %v174
    %v3033 = vpop.f32.mrf.mxu0
    %v3034 = vadd.f32 %v3021, %v3033
    %v3035 = vpop.f32.mrf.mxu0
    %3036 = vdwg.mxu0
    %3037 = vmatpush.bf16.msra.mxu0 %v2026
    %3038 = vmatpush.bf16.msra.mxu0 %v2024
    %3039 = vmatpush.bf16.msra.mxu0 %v2022
    %3040 = vmatpush.bf16.msra.mxu0 %v2020
    %3041 = vmatpush.bf16.msra.mxu0 %v2018
    %3042 = vmatpush.bf16.msra.mxu0 %v2016
    %3043 = vmatpush.bf16.msra.mxu0 %v2014
    %3044 = vmatpush.bf16.msra.mxu0 %v2012
    %3045 = vmatmul.bf16.gmra.mxu0 %v175
    %v3046 = vpop.f32.mrf.mxu0
    %v3047 = vadd.f32 %v3034, %v3046
    %v3048 = vpop.f32.mrf.mxu0
    %3049 = vdwg.mxu0
    %3050 = vmatpush.bf16.msra.mxu0 %v2042
    %3051 = vmatpush.bf16.msra.mxu0 %v2040
    %3052 = vmatpush.bf16.msra.mxu0 %v2038
    %3053 = vmatpush.bf16.msra.mxu0 %v2036
    %3054 = vmatpush.bf16.msra.mxu0 %v2034
    %3055 = vmatpush.bf16.msra.mxu0 %v2032
    %3056 = vmatpush.bf16.msra.mxu0 %v2030
    %3057 = vmatpush.bf16.msra.mxu0 %v2028
    %3058 = vmatmul.bf16.gmra.mxu0 %v176
    %v3059 = vpop.f32.mrf.mxu0
    %v3060 = vadd.f32 %v3047, %v3059
    %v3061 = vpop.f32.mrf.mxu0
    %3062 = vdwg.mxu0
    %3063 = vmatpush.bf16.msra.mxu0 %v2058
    %3064 = vmatpush.bf16.msra.mxu0 %v2056
    %3065 = vmatpush.bf16.msra.mxu0 %v2054
    %3066 = vmatpush.bf16.msra.mxu0 %v2052
    %3067 = vmatpush.bf16.msra.mxu0 %v2050
    %3068 = vmatpush.bf16.msra.mxu0 %v2048
    %3069 = vmatpush.bf16.msra.mxu0 %v2046
    %3070 = vmatpush.bf16.msra.mxu0 %v2044
    %3071 = vmatmul.bf16.gmra.mxu0 %v177
    %v3072 = vpop.f32.mrf.mxu0
    %v3073 = vadd.f32 %v3060, %v3072
    %v3074 = vpop.f32.mrf.mxu0
    %3075 = vdwg.mxu0
    %3076 = vmatpush.bf16.msra.mxu0 %v2074
    %3077 = vmatpush.bf16.msra.mxu0 %v2072
    %3078 = vmatpush.bf16.msra.mxu0 %v2070
    %3079 = vmatpush.bf16.msra.mxu0 %v2068
    %3080 = vmatpush.bf16.msra.mxu0 %v2066
    %3081 = vmatpush.bf16.msra.mxu0 %v2064
    %3082 = vmatpush.bf16.msra.mxu0 %v2062
    %3083 = vmatpush.bf16.msra.mxu0 %v2060
    %3084 = vmatmul.bf16.gmra.mxu0 %v178
    %v3085 = vpop.f32.mrf.mxu0
    %v3086 = vadd.f32 %v3073, %v3085
    %v3087 = vpop.f32.mrf.mxu0
    %3088 = vdwg.mxu0
    %3089 = vmatpush.bf16.msra.mxu0 %v2090
    %3090 = vmatpush.bf16.msra.mxu0 %v2088
    %3091 = vmatpush.bf16.msra.mxu0 %v2086
    %3092 = vmatpush.bf16.msra.mxu0 %v2084
    %3093 = vmatpush.bf16.msra.mxu0 %v2082
    %3094 = vmatpush.bf16.msra.mxu0 %v2080
    %3095 = vmatpush.bf16.msra.mxu0 %v2078
    %3096 = vmatpush.bf16.msra.mxu0 %v2076
    %3097 = vmatmul.bf16.gmra.mxu0 %v179
    %v3098 = vpop.f32.mrf.mxu0
    %v3099 = vadd.f32 %v3086, %v3098
    %v3100 = vpop.f32.mrf.mxu0
    %3101 = vdwg.mxu0
    %3102 = vmatpush.bf16.msra.mxu0 %v2106
    %3103 = vmatpush.bf16.msra.mxu0 %v2104
    %3104 = vmatpush.bf16.msra.mxu0 %v2102
    %3105 = vmatpush.bf16.msra.mxu0 %v2100
    %3106 = vmatpush.bf16.msra.mxu0 %v2098
    %3107 = vmatpush.bf16.msra.mxu0 %v2096
    %3108 = vmatpush.bf16.msra.mxu0 %v2094
    %3109 = vmatpush.bf16.msra.mxu0 %v2092
    %3110 = vmatmul.bf16.gmra.mxu0 %v180
    %v3111 = vpop.f32.mrf.mxu0
    %v3112 = vadd.f32 %v3099, %v3111
    %v3113 = vpop.f32.mrf.mxu0
    %3114 = vdwg.mxu0
    %v3115 = vmax.f32 %v2800, 0.0
    %v3116 = vmax.f32 %v3112, 0.0
    %v3117 = vpack.c.bf16 %v3115, %v3115
    %v3118 = vpack.c.bf16 %v3116, %v3116
    %v3119 = vld [vmem:[%s3] sm:$0xf]
    %v3120 = vld [vmem:[%s3 + $0x4] sm:$0xf]
    %v3121 = vld [vmem:[%s3 + $0x8] sm:$0xf]
    %v3122 = vld [vmem:[%s3 + $0xc] sm:$0xf]
    %v3123 = vld [vmem:[%s3 + $0x10] sm:$0xf]
    %v3124 = vld [vmem:[%s3 + $0x14] sm:$0xf]
    %v3125 = vld [vmem:[%s3 + $0x18] sm:$0xf]
    %v3126 = vld [vmem:[%s3 + $0x1c] sm:$0xf]
    %v3127 = vld [vmem:[%s3 + $0x20] sm:$0xf]
    %v3128 = vld [vmem:[%s3 + $0x24] sm:$0xf]
    %v3129 = vld [vmem:[%s3 + $0x28] sm:$0xf]
    %v3130 = vld [vmem:[%s3 + $0x2c] sm:$0xf]
    %v3131 = vld [vmem:[%s3 + $0x30] sm:$0xf]
    %v3132 = vld [vmem:[%s3 + $0x34] sm:$0xf]
    %v3133 = vld [vmem:[%s3 + $0x38] sm:$0xf]
    %v3134 = vld [vmem:[%s3 + $0x3c] sm:$0xf]
    %v3135 = vld [vmem:[%s3 + $0x40] sm:$0xf]
    %v3136 = vld [vmem:[%s3 + $0x44] sm:$0xf]
    %v3137 = vld [vmem:[%s3 + $0x48] sm:$0xf]
    %v3138 = vld [vmem:[%s3 + $0x4c] sm:$0xf]
    %v3139 = vld [vmem:[%s3 + $0x50] sm:$0xf]
    %v3140 = vld [vmem:[%s3 + $0x54] sm:$0xf]
    %v3141 = vld [vmem:[%s3 + $0x58] sm:$0xf]
    %v3142 = vld [vmem:[%s3 + $0x5c] sm:$0xf]
    %v3143 = vld [vmem:[%s3 + $0x60] sm:$0xf]
    %v3144 = vld [vmem:[%s3 + $0x64] sm:$0xf]
    %v3145 = vld [vmem:[%s3 + $0x68] sm:$0xf]
    %v3146 = vld [vmem:[%s3 + $0x6c] sm:$0xf]
    %v3147 = vld [vmem:[%s3 + $0x70] sm:$0xf]
    %v3148 = vld [vmem:[%s3 + $0x74] sm:$0xf]
    %v3149 = vld [vmem:[%s3 + $0x78] sm:$0xf]
    %v3150 = vld [vmem:[%s3 + $0x7c] sm:$0xf]
    %v3151 = vld [vmem:[#allocation8] sm:$0x1]
    %v3153 = vperm.slane %v3151, 0
    %v3187 = vunpack.c.l.b16 %v3119
    %v3188 = vunpack.c.l.b16 %v3120
    %v3189 = vunpack.c.l.b16 %v3121
    %v3190 = vunpack.c.l.b16 %v3122
    %v3191 = vunpack.c.l.b16 %v3123
    %v3192 = vunpack.c.l.b16 %v3124
    %v3193 = vunpack.c.l.b16 %v3125
    %v3194 = vunpack.c.l.b16 %v3126
    %v3195 = vunpack.c.l.b16 %v3127
    %v3196 = vunpack.c.l.b16 %v3128
    %v3197 = vunpack.c.l.b16 %v3129
    %v3198 = vunpack.c.l.b16 %v3130
    %v3199 = vunpack.c.l.b16 %v3131
    %v3200 = vunpack.c.l.b16 %v3132
    %v3201 = vunpack.c.l.b16 %v3133
    %v3202 = vunpack.c.l.b16 %v3134
    %v3203 = vunpack.c.l.b16 %v3135
    %v3204 = vunpack.c.l.b16 %v3136
    %v3205 = vunpack.c.l.b16 %v3137
    %v3206 = vunpack.c.l.b16 %v3138
    %v3207 = vunpack.c.l.b16 %v3139
    %v3208 = vunpack.c.l.b16 %v3140
    %v3209 = vunpack.c.l.b16 %v3141
    %v3210 = vunpack.c.l.b16 %v3142
    %v3211 = vunpack.c.l.b16 %v3143
    %v3212 = vunpack.c.l.b16 %v3144
    %v3213 = vunpack.c.l.b16 %v3145
    %v3214 = vunpack.c.l.b16 %v3146
    %v3215 = vunpack.c.l.b16 %v3147
    %v3216 = vunpack.c.l.b16 %v3148
    %v3217 = vunpack.c.l.b16 %v3149
    %v3218 = vunpack.c.l.b16 %v3150
    %v3219 = vpack.c.b16 %v3188, %v3187
    %v3220 = vpack.c.b16 %v3190, %v3189
    %v3221 = vpack.c.b16 %v3192, %v3191
    %v3222 = vpack.c.b16 %v3194, %v3193
    %v3223 = vpack.c.b16 %v3196, %v3195
    %v3224 = vpack.c.b16 %v3198, %v3197
    %v3225 = vpack.c.b16 %v3200, %v3199
    %v3226 = vpack.c.b16 %v3202, %v3201
    %v3227 = vpack.c.b16 %v3204, %v3203
    %v3228 = vpack.c.b16 %v3206, %v3205
    %v3229 = vpack.c.b16 %v3208, %v3207
    %v3230 = vpack.c.b16 %v3210, %v3209
    %v3231 = vpack.c.b16 %v3212, %v3211
    %v3232 = vpack.c.b16 %v3214, %v3213
    %v3233 = vpack.c.b16 %v3216, %v3215
    %v3234 = vpack.c.b16 %v3218, %v3217
    %3251 = vmatpush.bf16.msra.mxu0 %v3226
    %3252 = vmatpush.bf16.msra.mxu0 %v3225
    %3253 = vmatpush.bf16.msra.mxu0 %v3224
    %3254 = vmatpush.bf16.msra.mxu0 %v3223
    %3255 = vmatpush.bf16.msra.mxu0 %v3222
    %3256 = vmatpush.bf16.msra.mxu0 %v3221
    %3257 = vmatpush.bf16.msra.mxu0 %v3220
    %3258 = vmatpush.bf16.msra.mxu0 %v3219
    %3259 = vmatmul.bf16.gmra.mxu0 %v3117
    %v3260 = vpop.f32.mrf.mxu0
    %v3261 = vadd.f32 %v3153, %v3260
    %v3262 = vpop.f32.mrf.mxu0
    %3263 = vdwg.mxu0
    %3264 = vmatpush.bf16.msra.mxu0 %v3234
    %3265 = vmatpush.bf16.msra.mxu0 %v3233
    %3266 = vmatpush.bf16.msra.mxu0 %v3232
    %3267 = vmatpush.bf16.msra.mxu0 %v3231
    %3268 = vmatpush.bf16.msra.mxu0 %v3230
    %3269 = vmatpush.bf16.msra.mxu0 %v3229
    %3270 = vmatpush.bf16.msra.mxu0 %v3228
    %3271 = vmatpush.bf16.msra.mxu0 %v3227
    %3272 = vmatmul.bf16.gmra.mxu0 %v3118
    %v3273 = vpop.f32.mrf.mxu0
    %v3274 = vadd.f32 %v3261, %v3273
    %v3275 = vpop.f32.mrf.mxu0
    %3276 = vdwg.mxu0
    %v3277 = vmax.f32 %v3274, 0.0
    %v3278 = vpack.c.bf16 %v3277, %v3277
    %v3279 = vld [vmem:[%s5] sm:$0xf]
    %v3280 = vld [vmem:[%s5 + $0x4] sm:$0xf]
    %v3281 = vld [vmem:[%s5 + $0x8] sm:$0xf]
    %v3282 = vld [vmem:[%s5 + $0xc] sm:$0xf]
    %v3283 = vld [vmem:[%s5 + $0x10] sm:$0xf]
    %v3284 = vld [vmem:[%s5 + $0x14] sm:$0xf]
    %v3285 = vld [vmem:[%s5 + $0x18] sm:$0xf]
    %v3286 = vld [vmem:[%s5 + $0x1c] sm:$0xf]
    %v3287 = vld [vmem:[#allocation10] sm:$0x1]
    %v3289 = vperm.slane %v3287, 0
    %v3299 = vunpack.c.l.b16 %v3279
    %v3300 = vunpack.c.l.b16 %v3280
    %v3301 = vunpack.c.l.b16 %v3281
    %v3302 = vunpack.c.l.b16 %v3282
    %v3303 = vunpack.c.l.b16 %v3283
    %v3304 = vunpack.c.l.b16 %v3284
    %v3305 = vunpack.c.l.b16 %v3285
    %v3306 = vunpack.c.l.b16 %v3286
    %v3307 = vpack.c.b16 %v3300, %v3299
    %v3308 = vpack.c.b16 %v3302, %v3301
    %v3309 = vpack.c.b16 %v3304, %v3303
    %v3310 = vpack.c.b16 %v3306, %v3305
    %vm3315 = vcmask 523264
    %v3317 = vsel %vm3315, %v3278, 0
    %3319 = vmatpush.bf16.msra.mxu0 0
    %3320 = vmatpush.bf16.msra.mxu0 0
    %3321 = vmatpush.bf16.msra.mxu0 0
    %3322 = vmatpush.bf16.msra.mxu0 0
    %3323 = vmatpush.bf16.msra.mxu0 %v3310
    %3324 = vmatpush.bf16.msra.mxu0 %v3309
    %3325 = vmatpush.bf16.msra.mxu0 %v3308
    %3326 = vmatpush.bf16.msra.mxu0 %v3307
    %3327 = vmatmul.bf16.gmra.mxu0 %v3317
    %v3328 = vpop.f32.mrf.mxu0
    %v3329 = vadd.f32 %v3289, %v3328
    %v3330 = vpop.f32.mrf.mxu0
    %3331 = vdwg.mxu0
    %v3332 = vmax.f32 %v3329, 0.0
    %v3333 = vpack.c.bf16 %v3332, %v3332
    %v3334 = vld [vmem:[#allocation11] sm:$0xf]
    %v3335 = vld [vmem:[#allocation11 + $0x4] sm:$0xf]
    %v3336 = vld [vmem:[#allocation11 + $0x8] sm:$0xf]
    %v3337 = vld [vmem:[#allocation11 + $0xc] sm:$0x3]
    %v3338 = vld [vmem:[#allocation13] sm:$0x1]
    %v3340 = vperm.slane %v3338, 0
    %v3346 = vunpack.c.l.b16 %v3334
    %v3347 = vunpack.c.l.b16 %v3335
    %v3348 = vunpack.c.l.b16 %v3336
    %v3349 = vunpack.c.l.b16 %v3337
    %v3350 = vpack.c.b16 %v3347, %v3346
    %v3351 = vpack.c.b16 %v3349, %v3348
    %vm3353 = vcmask 228352
    %v3355 = vsel %vm3353, %v3333, 0
    %vm3357 = vcmask 1045504
    %v3359 = vsel %vm3357, %v3351, 0
    %3361 = vmatpush.bf16.msra.mxu0 0
    %3362 = vmatpush.bf16.msra.mxu0 0
    %3363 = vmatpush.bf16.msra.mxu0 0
    %3364 = vmatpush.bf16.msra.mxu0 0
    %3365 = vmatpush.bf16.msra.mxu0 0
    %3366 = vmatpush.bf16.msra.mxu0 0
    %3367 = vmatpush.bf16.msra.mxu0 %v3359
    %3368 = vmatpush.bf16.msra.mxu0 %v3350
    %3369 = vmatmul.bf16.gmra.mxu0 %v3355
    %v3370 = vpop.f32.mrf.mxu0
    %v3371 = vadd.f32 %v3340, %v3370
    %v3372 = vpop.f32.mrf.mxu0
    %3373 = vdwg.mxu0
    %3374 = vst [vmem:[#allocation14] sm:$0xff] %v3371
    // Predicated region
    $region66: #{tpu_custom_call.1} parent=1 // pred_check
      _
    $region67: #{tpu_custom_call.1} parent=1 // pred_check_branch
      %3376 = sbr.rel (0) target = $region69
    $region68: #{tpu_custom_call.1} parent=1 // pred_region
      %3378 = vsyncadd [#allocation4], 0
      %s3380 = sshll.u32 [#allocation14], 4
      %s3381 = int_to_ptr.vmem [resolvable:$true] %s3380
      %s3382 = sshll.u32 %s9, 4
      %s3383 = int_to_ptr.hbm [resolvable:$true] %s3382
      %3385 = dma.vmem_to_hbm [thread:$0]  %s3381, 128, %s3383, [#allocation4]
    $region69: #{tpu_custom_call.1} parent=1 // pred_fallthru
      _
    // Predicated region
    $region70: #{tpu_custom_call.1} parent=1 // pred_check
      _
    $region71: #{tpu_custom_call.1} parent=1 // pred_check_branch
      %3387 = sbr.rel (0) target = $region73
    $region72: #{tpu_custom_call.1} parent=1 // pred_region
      %3389 = dma.done [#allocation4], 128
    $region73: #{tpu_custom_call.1} parent=1 // pred_fallthru
      _
    %3390 = vsyncpa [#allocation3], 1
    %3391 = vsyncpa [#allocation6], 1
    %3392 = vsyncpa [#allocation9], 1
    %3393 = vsyncpa [#allocation12], 1
    %3394 = vsyncpa [#allocation4], 1

</llo_original>
